<compile_context>
chip_gen: v7x
topology: tpu7x:2x2x1
jax: 0.10.0
libtpu: 0.0.40
codegen_flags: <defaults>
</compile_context>

<pallas_src>
import functools
import math

import numpy as np
import jax
import jax.numpy as jnp
from jax.experimental import pallas as pl
from jax.experimental.pallas import tpu as pltpu


# ----------------------------------------------------------------------------
# Glue: pyramid-pooling averaging matrix (AdaptiveAvgPool3d semantics)
# ----------------------------------------------------------------------------
def _adaptive_pool_matrix_3d(d, h, w, sizes):
    """Return P of shape (d*h*w, sum(s**3)) s.t. pooled_flat = feat_flat^T @ P."""
    def bins(L, S):
        return [((i * L) // S, -(-((i + 1) * L) // S)) for i in range(S)]

    mats = []
    for s in sizes:
        bd, bh, bw = bins(d, s), bins(h, s), bins(w, s)
        P = np.zeros((d * h * w, s * s * s), dtype=np.float32)
        for oi, (d0, d1) in enumerate(bd):
            for oj, (h0, h1) in enumerate(bh):
                for ok, (w0, w1) in enumerate(bw):
                    cnt = (d1 - d0) * (h1 - h0) * (w1 - w0)
                    out_idx = (oi * s + oj) * s + ok
                    for ii in range(d0, d1):
                        for jj in range(h0, h1):
                            for kk in range(w0, w1):
                                P[(ii * h + jj) * w + kk, out_idx] = 1.0 / cnt
        mats.append(P)
    return np.concatenate(mats, axis=1)


# ----------------------------------------------------------------------------
# Pallas kernel: one (tile_N, C) slab of spatial positions per grid step
# ----------------------------------------------------------------------------
def _spatial_propagate_kernel(x_ref, wqk_ref, bqk_ref, wvo_ref, bo_ref,
                              ctx_ref, aff_ref, *, scale):
    # affinity logits over (padded) pooled positions: (tile_N, Mp), lane-dense
    logits = jnp.dot(x_ref[...], wqk_ref[...],
                     preferred_element_type=jnp.float32)
    logits = (logits + bqk_ref[...]) * scale      # padded cols carry -1e30 bias

    # f32 softmax over pooled positions (padded cols -> exp underflows to 0)
    m = jnp.max(logits, axis=-1, keepdims=True)
    e = jnp.exp(logits - m)
    s = jnp.sum(e, axis=-1, keepdims=True)
    prob = e * pl.reciprocal(s, approx=True)      # EUP reciprocal, not VPU div

    # context + folded output projection: (tile_N, C)
    ctx = jnp.dot(prob.astype(wvo_ref.dtype), wvo_ref[...],
                  preferred_element_type=jnp.float32) + bo_ref[...]

    ctx_ref[...] = ctx.astype(ctx_ref.dtype)
    aff_ref[...] = prob.astype(aff_ref.dtype)


def _pick_tile_n(n):
    for t in (1024, 512, 256, 128, 64, 32, 16, 8):
        if n % t == 0:
            return t
    return n


def spatial_propagate_pallas(x, params, *, matmul_dtype=jnp.float32, tile_n=None):
    """x: (B, C, D, H, W) f32 -> (context (B,C,D,H,W), affinity (B,D,H,W,M))."""
    b, C, d, h, w = x.shape
    N = d * h * w
    P = params["pmat"]                      # (N, M)
    M = P.shape[1]
    Mp = ((M + 127) // 128) * 128           # pad pooled axis to lane multiple
    cq = params["wq"].shape[1]
    scale = float(cq) ** -0.5

    x_flat = jnp.transpose(x.reshape(b, C, N), (0, 2, 1))       # (B, N, C) f32

    # ---- XLA glue: pooled features + fold the thin cq projections away ----
    xp = jnp.einsum("nm,bnc->bmc", P, x_flat)                    # (B, M, C)
    kp = xp @ params["wk"] + params["bk"]                        # (B, M, cq)
    vp = xp @ params["wv"] + params["bv"]                        # (B, M, cq)
    wqk = jnp.einsum("cq,bmq->bcm", params["wq"], kp)            # (B, C, M)
    bqk = jnp.einsum("q,bmq->bm", params["bq"][0], kp)[:, None]  # (B, 1, M)
    wvo = jnp.einsum("bmq,qc->bmc", vp, params["wo"])            # (B, M, C)
    bo = params["bo"].astype(jnp.float32)                        # (1, C)

    # ---- pad M -> Mp: zero weight columns/rows, -1e30 bias masks the logits
    pad = Mp - M
    wqk = jnp.pad(wqk, ((0, 0), (0, 0), (0, pad)))
    wvo = jnp.pad(wvo, ((0, 0), (0, pad), (0, 0)))
    bqk = jnp.pad(bqk.astype(jnp.float32), ((0, 0), (0, 0), (0, pad)),
                  constant_values=-1e30)

    # ---- matmul-operand dtype (bf16 on v6e/v7x); softmax/bias math stays f32
    x_in = x_flat.astype(matmul_dtype)
    wqk = wqk.astype(matmul_dtype)
    wvo = wvo.astype(matmul_dtype)

    if tile_n is None:
        tile_n = _pick_tile_n(N)
    grid = (b, N // tile_n)

    kernel = functools.partial(_spatial_propagate_kernel, scale=scale)

    ctx_flat, aff_pad = pl.pallas_call(
        kernel,
        out_shape=(jax.ShapeDtypeStruct((b, N, C), jnp.float32),
                   jax.ShapeDtypeStruct((b, N, Mp), jnp.float32)),
        grid=grid,
        in_specs=[
            pl.BlockSpec((None, tile_n, C), lambda i, j: (i, j, 0)),   # x tile
            pl.BlockSpec((None, C, Mp), lambda i, j: (i, 0, 0)),        # Wqk[b]
            pl.BlockSpec((None, 1, Mp), lambda i, j: (i, 0, 0)),        # bqk[b]
            pl.BlockSpec((None, Mp, C), lambda i, j: (i, 0, 0)),        # Wvo[b]
            pl.BlockSpec((1, C), lambda i, j: (0, 0)),                  # bo
        ],
        out_specs=(pl.BlockSpec((None, tile_n, C), lambda i, j: (i, j, 0)),
                   pl.BlockSpec((None, tile_n, Mp), lambda i, j: (i, j, 0))),
        compiler_params=pltpu.CompilerParams(
            dimension_semantics=("parallel", "parallel"),
            vmem_limit_bytes=32 * 1024 * 1024),
    )(x_in, wqk, bqk, wvo, bo)

    context = jnp.transpose(ctx_flat, (0, 2, 1)).reshape(b, C, d, h, w)
    affinity = aff_pad[..., :M].reshape(b, d, h, w, M)   # drop the 12 pad cols
    return context, affinity


# ----------------------------------------------------------------------------
# Deterministic parameter init (Conv3d 1x1x1, bias=False + BatchNorm3d folded)
# ----------------------------------------------------------------------------
def init_params(key, in_channel, scale, pp_sizes, spatial):
    cq = in_channel // scale
    ks = jax.random.split(key, 8)

    def conv_bn(kw, kbn, cin, cout):
        bound = 1.0 / math.sqrt(cin)                    # torch conv default init
        W = jax.random.uniform(kw, (cout, cin), jnp.float32, -bound, bound)
        k1, k2, k3, k4 = jax.random.split(kbn, 4)
        gamma = 1.0 + 0.1 * jax.random.normal(k1, (cout,), jnp.float32)
        beta = 0.1 * jax.random.normal(k2, (cout,), jnp.float32)
        rmean = 0.1 * jax.random.normal(k3, (cout,), jnp.float32)
        rvar = 1.0 + 0.1 * jax.random.uniform(k4, (cout,), jnp.float32)
        s = gamma / jnp.sqrt(rvar + 1e-5)
        w_eff = (W * s[:, None]).T                      # (cin, cout)
        b_eff = (beta - rmean * s).reshape(1, cout)
        return w_eff.astype(jnp.float32), b_eff.astype(jnp.float32)

    wq, bq = conv_bn(ks[0], ks[1], in_channel, cq)
    wk, bk = conv_bn(ks[2], ks[3], in_channel, cq)
    wv, bv = conv_bn(ks[4], ks[5], in_channel, cq)
    wo, bo = conv_bn(ks[6], ks[7], cq, in_channel)

    d, h, w = spatial
    pmat = jnp.asarray(_adaptive_pool_matrix_3d(d, h, w, pp_sizes))
    return dict(wq=wq, bq=bq, wk=wk, bk=bk, wv=wv, bv=bv, wo=wo, bo=bo, pmat=pmat)


# ----------------------------------------------------------------------------
# Pure-JAX reference (faithful to the PyTorch op order) for correctness check
# ----------------------------------------------------------------------------
def spatial_propagate_ref(x, params):
    b, C, d, h, w = x.shape
    N = d * h * w
    P = params["pmat"]
    cq = params["wq"].shape[1]
    xf = jnp.transpose(x.reshape(b, C, N), (0, 2, 1))                  # (B,N,C)
    q = xf @ params["wq"] + params["bq"]                               # (B,N,cq)
    k = xf @ params["wk"] + params["bk"]
    v = xf @ params["wv"] + params["bv"]
    kp = jnp.einsum("bnc,nm->bcm", k, P)                               # (B,cq,M)
    vp = jnp.einsum("bnc,nm->bmc", v, P)                               # (B,M,cq)
    aff = jnp.einsum("bnc,bcm->bnm", q, kp) * (float(cq) ** -0.5)
    aff = jax.nn.softmax(aff, axis=-1)
    ctx = jnp.einsum("bnm,bmc->bnc", aff, vp)
    out = ctx @ params["wo"] + params["bo"]                            # (B,N,C)
    context = jnp.transpose(out, (0, 2, 1)).reshape(b, C, d, h, w)
    return context, aff.reshape(b, d, h, w, -1)


if __name__ == "__main__":
    B, C, D, H, W = 2, 16, 8, 8, 8           # in_channel=16, scale=4 -> cq=4
    PP_SIZES = (1, 3, 6, 8)                  # M = 1 + 27 + 216 + 512 = 756

    key = jax.random.PRNGKey(0)
    kx, kp = jax.random.split(key)
    x = jax.random.normal(kx, (B, C, D, H, W), jnp.float32)
    params = init_params(kp, C, 4, PP_SIZES, (D, H, W))

    ctx_ref, aff_ref = spatial_propagate_ref(x, params)

    # f32 matmul-operand path (v5e-safe), small tile to exercise N tiling.
    ctx32, aff32 = spatial_propagate_pallas(x, params,
                                            matmul_dtype=jnp.float32, tile_n=128)
    ctx32, aff32 = jax.block_until_ready(ctx32), jax.block_until_ready(aff32)
    assert ctx32.shape == (B, C, D, H, W) and aff32.shape == (B, D, H, W, 756)
    np.testing.assert_allclose(np.asarray(ctx32), np.asarray(ctx_ref),
                               rtol=5e-3, atol=5e-3)
    np.testing.assert_allclose(np.asarray(aff32), np.asarray(aff_ref),
                               rtol=5e-3, atol=5e-3)

    # bf16 matmul-operand path (v6e/v7x full-rate MXU); softmax stays f32.
    ctxbf, affbf = spatial_propagate_pallas(x, params, matmul_dtype=jnp.bfloat16)
    ctxbf, affbf = jax.block_until_ready(ctxbf), jax.block_until_ready(affbf)
    np.testing.assert_allclose(np.asarray(ctxbf), np.asarray(ctx_ref),
                               rtol=2e-2, atol=2e-2)
    np.testing.assert_allclose(np.asarray(affbf), np.asarray(aff_ref),
                               rtol=2e-2, atol=2e-2)

    # TODO(synk): optionally emit the affinity output in bf16 to halve its HBM
    # write if downstream consumers tolerate it.
    print("KERNEL_OK")
</pallas_src>

<mosaic_0001>
module attributes {stable_mosaic.version = 11 : i64} {
  func.func @_spatial_propagate_kernel(%arg0: i32, %arg1: i32, %arg2: memref<1x128x16xf32, #tpu.memory_space<vmem>>, %arg3: memref<1x16x768xf32, #tpu.memory_space<vmem>>, %arg4: memref<1x1x768xf32, #tpu.memory_space<vmem>>, %arg5: memref<1x768x16xf32, #tpu.memory_space<vmem>>, %arg6: memref<1x16xf32, #tpu.memory_space<vmem>>, %arg7: memref<1x128x16xf32, #tpu.memory_space<vmem>>, %arg8: memref<1x128x768xf32, #tpu.memory_space<vmem>>) attributes {dimension_semantics = [#tpu.dimension_semantics<parallel>, #tpu.dimension_semantics<parallel>], iteration_bounds = array<i64: 2, 4>, scalar_prefetch = 0 : i64, scratch_operands = 0 : i64, tpu.core_type = #tpu.core_type<tc>, window_params = [{transform_indices = @transform_0, window_bounds = array<i64: 1, 128, 16>}, {transform_indices = @transform_1, window_bounds = array<i64: 1, 16, 768>}, {transform_indices = @transform_2, window_bounds = array<i64: 1, 1, 768>}, {transform_indices = @transform_3, window_bounds = array<i64: 1, 768, 16>}, {pipeline_mode = #tpu.pipeline_mode<synchronous>, transform_indices = @transform_4, window_bounds = array<i64: 1, 16>}, {transform_indices = @transform_5, window_bounds = array<i64: 1, 128, 16>}, {transform_indices = @transform_6, window_bounds = array<i64: 1, 128, 768>}]} {
    %c0 = arith.constant 0 : index
    %c0_0 = arith.constant 0 : index
    %c0_1 = arith.constant 0 : index
    %0 = vector.load %arg2[%c0, %c0_0, %c0_1] : memref<1x128x16xf32, #tpu.memory_space<vmem>>, vector<1x128x16xf32>
    %1 = vector.shape_cast %0 : vector<1x128x16xf32> to vector<128x16xf32>
    %c0_2 = arith.constant 0 : index
    %c0_3 = arith.constant 0 : index
    %c0_4 = arith.constant 0 : index
    %2 = vector.load %arg3[%c0_2, %c0_3, %c0_4] : memref<1x16x768xf32, #tpu.memory_space<vmem>>, vector<1x16x768xf32>
    %3 = vector.shape_cast %2 : vector<1x16x768xf32> to vector<16x768xf32>
    %cst = arith.constant dense<0.000000e+00> : vector<128x768xf32>
    %4 = tpu.matmul %1, %3, %cst {dimension_numbers = #tpu.dot_dimension_numbers<[1], [0], [0], [1], [0, 0, 1, 1], [], []>} : vector<128x16xf32>, vector<16x768xf32>, vector<128x768xf32> -> vector<128x768xf32>
    %c0_5 = arith.constant 0 : index
    %c0_6 = arith.constant 0 : index
    %c0_7 = arith.constant 0 : index
    %5 = vector.load %arg4[%c0_5, %c0_6, %c0_7] : memref<1x1x768xf32, #tpu.memory_space<vmem>>, vector<1x1x768xf32>
    %6 = vector.shape_cast %5 : vector<1x1x768xf32> to vector<1x768xf32>
    %7 = vector.broadcast %6 : vector<1x768xf32> to vector<128x768xf32>
    %8 = arith.addf %4, %7 : vector<128x768xf32>
    %cst_8 = arith.constant 5.000000e-01 : f32
    %9 = vector.broadcast %cst_8 : f32 to vector<128x768xf32>
    %10 = arith.mulf %8, %9 : vector<128x768xf32>
    %cst_9 = arith.constant dense<0xFF800000> : vector<128xf32>
    %11 = vector.multi_reduction <maximumf>, %10, %cst_9 [1] : vector<128x768xf32> to vector<128xf32>
    %12 = vector.shape_cast %11 : vector<128xf32> to vector<128x1xf32>
    %13 = vector.broadcast %12 : vector<128x1xf32> to vector<128x768xf32>
    %14 = arith.subf %10, %13 : vector<128x768xf32>
    %15 = math.exp %14 : vector<128x768xf32>
    %cst_10 = arith.constant dense<0.000000e+00> : vector<128xf32>
    %16 = vector.multi_reduction <add>, %15, %cst_10 [1] : vector<128x768xf32> to vector<128xf32>
    %17 = vector.shape_cast %16 : vector<128xf32> to vector<128x1xf32>
    %18 = tpu.reciprocal %17 {approx = true} : vector<128x1xf32> -> vector<128x1xf32>
    %19 = vector.broadcast %18 : vector<128x1xf32> to vector<128x768xf32>
    %20 = arith.mulf %15, %19 : vector<128x768xf32>
    %c0_11 = arith.constant 0 : index
    %c0_12 = arith.constant 0 : index
    %c0_13 = arith.constant 0 : index
    %21 = vector.load %arg5[%c0_11, %c0_12, %c0_13] : memref<1x768x16xf32, #tpu.memory_space<vmem>>, vector<1x768x16xf32>
    %22 = vector.shape_cast %21 : vector<1x768x16xf32> to vector<768x16xf32>
    %cst_14 = arith.constant dense<0.000000e+00> : vector<128x16xf32>
    %23 = tpu.matmul %20, %22, %cst_14 {dimension_numbers = #tpu.dot_dimension_numbers<[1], [0], [0], [1], [0, 0, 1, 1], [], []>} : vector<128x768xf32>, vector<768x16xf32>, vector<128x16xf32> -> vector<128x16xf32>
    %c0_15 = arith.constant 0 : index
    %c0_16 = arith.constant 0 : index
    %24 = vector.load %arg6[%c0_15, %c0_16] : memref<1x16xf32, #tpu.memory_space<vmem>>, vector<1x16xf32>
    %25 = vector.broadcast %24 : vector<1x16xf32> to vector<128x16xf32>
    %26 = arith.addf %23, %25 : vector<128x16xf32>
    %c0_17 = arith.constant 0 : index
    %c0_18 = arith.constant 0 : index
    %c0_19 = arith.constant 0 : index
    %27 = vector.load %arg7[%c0_17, %c0_18, %c0_19] : memref<1x128x16xf32, #tpu.memory_space<vmem>>, vector<1x128x16xf32>
    %28 = vector.shape_cast %27 : vector<1x128x16xf32> to vector<128x16xf32>
    %29 = vector.shape_cast %26 : vector<128x16xf32> to vector<1x128x16xf32>
    tpu.vector_store %arg7[%c0_17, %c0_18, %c0_19], %29 {strides = array<i32>} : memref<1x128x16xf32, #tpu.memory_space<vmem>>, vector<1x128x16xf32>,
    %c0_20 = arith.constant 0 : index
    %c0_21 = arith.constant 0 : index
    %c0_22 = arith.constant 0 : index
    %30 = vector.load %arg8[%c0_20, %c0_21, %c0_22] : memref<1x128x768xf32, #tpu.memory_space<vmem>>, vector<1x128x768xf32>
    %31 = vector.shape_cast %30 : vector<1x128x768xf32> to vector<128x768xf32>
    %32 = vector.shape_cast %20 : vector<128x768xf32> to vector<1x128x768xf32>
    tpu.vector_store %arg8[%c0_20, %c0_21, %c0_22], %32 {strides = array<i32>} : memref<1x128x768xf32, #tpu.memory_space<vmem>>, vector<1x128x768xf32>,
    return
  }
  func.func @transform_0(%arg0: i32, %arg1: i32) -> (i32, i32, i32) {
    %c0_i32 = arith.constant 0 : i32
    %c0_i32_0 = arith.constant 0 : i32
    return %arg0, %arg1, %c0_i32 : i32, i32, i32
  }
  func.func @transform_1(%arg0: i32, %arg1: i32) -> (i32, i32, i32) {
    %c0_i32 = arith.constant 0 : i32
    %c0_i32_0 = arith.constant 0 : i32
    %c0_i32_1 = arith.constant 0 : i32
    return %arg0, %c0_i32, %c0_i32_0 : i32, i32, i32
  }
  func.func @transform_2(%arg0: i32, %arg1: i32) -> (i32, i32, i32) {
    %c0_i32 = arith.constant 0 : i32
    %c0_i32_0 = arith.constant 0 : i32
    %c0_i32_1 = arith.constant 0 : i32
    return %arg0, %c0_i32, %c0_i32_0 : i32, i32, i32
  }
  func.func @transform_3(%arg0: i32, %arg1: i32) -> (i32, i32, i32) {
    %c0_i32 = arith.constant 0 : i32
    %c0_i32_0 = arith.constant 0 : i32
    %c0_i32_1 = arith.constant 0 : i32
    return %arg0, %c0_i32, %c0_i32_0 : i32, i32, i32
  }
  func.func @transform_4(%arg0: i32, %arg1: i32) -> (i32, i32) {
    %c0_i32 = arith.constant 0 : i32
    %c0_i32_0 = arith.constant 0 : i32
    %c0_i32_1 = arith.constant 0 : i32
    return %c0_i32, %c0_i32_0 : i32, i32
  }
  func.func @transform_5(%arg0: i32, %arg1: i32) -> (i32, i32, i32) {
    %c0_i32 = arith.constant 0 : i32
    %c0_i32_0 = arith.constant 0 : i32
    return %arg0, %arg1, %c0_i32 : i32, i32, i32
  }
  func.func @transform_6(%arg0: i32, %arg1: i32) -> (i32, i32, i32) {
    %c0_i32 = arith.constant 0 : i32
    %c0_i32_0 = arith.constant 0 : i32
    return %arg0, %arg1, %c0_i32 : i32, i32, i32
  }
}

</mosaic_0001>

<llo_original>
// kernel: tpu_custom_call.1
$region0: #{tpu_custom_call.1}
  #allocation0 [shape = 'u32[]', space=smem, size = 0x4, offset = 0x4, fixed_abs, tag = 'smem constant byte address 0x4 - core index']
  #allocation1 [shape = 'u32[144,128]{1,0:T(1,128)}', space=vmem, size = 0x12000, scoped, tag = 'internal scratch']
  %s0 = inlined_call_operand.vmem [shape: f32[2,512,16], index: 0, kind: input, shape index: {}]
  %s1 = inlined_call_operand.hbm [shape: f32[2,16,768], index: 1, kind: input, shape index: {}]
  %s2 = inlined_call_operand.hbm [shape: f32[2,1,768], index: 2, kind: input, shape index: {}]
  %s3 = inlined_call_operand.vmem [shape: f32[2,768,16], index: 3, kind: input, shape index: {}]
  %s4 = inlined_call_operand.hbm [shape: f32[1,16], index: 4, kind: input, shape index: {}]
  %s5 = inlined_call_operand.vmem [shape: f32[2,512,16], index: 5, kind: output, shape index: {0}]
  %s6 = inlined_call_operand.hbm [shape: f32[2,512,768], index: 6, kind: output, shape index: {1}]
  %7 = xla_tuple %s5, %s6
  %s8 = sld [smem:[#allocation0]]
  $region73: #{tpu_custom_call.1} parent=0
    _
  %s10 = ssub.s32 1, %s8
  %s11 = scalar_select 0, %s10, %s8
  $region1: #{tpu_custom_call.1} parent=0
    #allocation2 [shape = 'u8[98304]{0}', space=vmem, size = 0x18000, scoped, tag = 'input window, operand 1']
    #allocation3 [shape = 's32[2]{0}', space=sflag, size = 0x8, scoped, tag = 'scoped memory for tpu_custom_call.1']
    #allocation4 [shape = 's32[2]{0}', space=sflag, size = 0x8, scoped, tag = 'scoped memory for tpu_custom_call.1']
    #allocation5 [shape = 'u8[6144]{0}', space=vmem, size = 0x1800, scoped, tag = 'input window, operand 2']
    #allocation6 [shape = 's32[2]{0}', space=sflag, size = 0x8, scoped, tag = 'scoped memory for tpu_custom_call.1']
    #allocation7 [shape = 'u8[512]{0}', space=vmem, size = 0x400, scoped, tag = 'input window, operand 4, single buffered']
    #allocation8 [shape = 'u8[786432]{0}', space=vmem, size = 0xc0000, scoped, tag = 'output window, operand 1']
    %12 = vsyncpa [#allocation3], 0
    %s13 = scalar_lea.sflag [#allocation3], 1
    %14 = vsyncpa %s13, 0
    %15 = vsyncpa [#allocation6], 0
    %s16 = scalar_lea.sflag [#allocation6], 1
    %17 = vsyncpa %s16, 0
    %18 = vsyncpa [#allocation4], 0
    %s19 = scalar_lea.sflag [#allocation4], 1
    %20 = vsyncpa %s19, 0
    loop: start=0, step=1, limit=10
    $region2: #{tpu_custom_call.1} parent=1 // loop_pre_header
      _
    $region3: #{tpu_custom_call.1} parent=1 // loop_header
      %s22 = sphi 0, %s26
      %p23 = scmp.ge.s32.totalorder %s22, 10
      %s29 = sphi 0, %s41
      %s30 = sphi 0, %s37
      %s31 = sphi 0, %s29
      %s32 = sphi 0, %s30
      %s33 = sphi 0, %s31
      %s34 = sphi 0, %s32
      %s46 = sphi 0, %s48
      %s49 = sphi 0, %s46
      %s50 = sphi 0, %s49
      %s66 = sphi 0, %s50
      %s72 = sphi 0, %s74
      %s75 = sphi 0, %s72
      %s76 = sphi 0, %s75
      %s92 = sphi 0, %s76
      %s98 = sphi 0, %s100
      %s101 = sphi 0, %s98
      %s102 = sphi 0, %s101
      %s118 = sphi 0, %s102
      %s124 = sphi 0, %s126
      %s127 = sphi 0, %s124
      %s128 = sphi 0, %s127
      %s144 = sphi 0, %s128
      %s148 = sphi 0, %s148
      %s150 = sphi 0, %s148
      %s151 = sphi 0, %s150
      %s165 = sphi 0, %s151
      %s173 = sphi 0, %s175
      %s176 = sphi 0, %s173
      %s177 = sphi 0, %s176
      %s193 = sphi 0, %s177
      %s201 = sphi 0, %s203
      %s204 = sphi 0, %s201
      %s205 = sphi 0, %s204
      %s221 = sphi 0, %s205
    $region4: #{tpu_custom_call.1} parent=1 // loop_header_branch
      %25 = sbr.rel (%p23) target = $region8
    $region5: #{tpu_custom_call.1} parent=1 // loop_body
      %s27 = ssub.s32 %s22, 1
      %s28 = ssub.s32 %s22, 2
      %s35 = sadd.s32 1, %s30
      %p36 = scmp.ge.s32.totalorder %s35, 4
      %s37 = scalar_select %p36, 0, %s35
      %s38 = sadd.s32 1, %s29
      %s39 = scalar_select %p36, %s38, %s29
      %p40 = scmp.ge.s32.totalorder %s39, 2
      %s41 = scalar_select %p40, 0, %s39
      %s42 = ssub.s32 %s29, %s41
      %s43 = ssub.s32 %s30, %s37
      %s44 = sor.u32 %s42, %s43
      %p45 = scmp.eq.s32.totalorder %s44, 0
      %s47 = sadd.s32 %s46, 1
      %s48 = scalar_select %p45, %s46, %s47
      %p51 = pneg %p45
      %p52 = scmp.eq.s32.totalorder %s22, 7
      %p53 = por %p51, %p52
      %p54 = scmp.ne.s32.totalorder %s46, %s49
      %p55 = scmp.eq.s32.totalorder %s22, 0
      %p56 = por %p54, %p55
      %p57 = scmp.ne.s32.totalorder %s46, %s49
      %p58 = scmp.eq.s32.totalorder %s27, 7
      %p59 = por %p57, %p58
      %p60 = scmp.ne.s32.totalorder %s49, %s50
      %p61 = scmp.eq.s32.totalorder %s27, 0
      %p62 = por %p60, %p61
      %p63 = scmp.ne.s32.totalorder %s49, %s50
      %p64 = scmp.eq.s32.totalorder %s28, 7
      %p65 = por %p63, %p64
      %p67 = scmp.ne.s32.totalorder %s50, %s66
      %p68 = scmp.eq.s32.totalorder %s28, 0
      %p69 = por %p67, %p68
      %s70 = ssub.s32 %s29, %s41
      %p71 = scmp.eq.s32.totalorder %s70, 0
      %s73 = sadd.s32 %s72, 1
      %s74 = scalar_select %p71, %s72, %s73
      %p77 = pneg %p71
      %p78 = scmp.eq.s32.totalorder %s22, 7
      %p79 = por %p77, %p78
      %p80 = scmp.ne.s32.totalorder %s72, %s75
      %p81 = scmp.eq.s32.totalorder %s22, 0
      %p82 = por %p80, %p81
      %p83 = scmp.ne.s32.totalorder %s72, %s75
      %p84 = scmp.eq.s32.totalorder %s27, 7
      %p85 = por %p83, %p84
      %p86 = scmp.ne.s32.totalorder %s75, %s76
      %p87 = scmp.eq.s32.totalorder %s27, 0
      %p88 = por %p86, %p87
      %p89 = scmp.ne.s32.totalorder %s75, %s76
      %p90 = scmp.eq.s32.totalorder %s28, 7
      %p91 = por %p89, %p90
      %p93 = scmp.ne.s32.totalorder %s76, %s92
      %p94 = scmp.eq.s32.totalorder %s28, 0
      %p95 = por %p93, %p94
      %s96 = ssub.s32 %s29, %s41
      %p97 = scmp.eq.s32.totalorder %s96, 0
      %s99 = sadd.s32 %s98, 1
      %s100 = scalar_select %p97, %s98, %s99
      %p103 = pneg %p97
      %p104 = scmp.eq.s32.totalorder %s22, 7
      %p105 = por %p103, %p104
      %p106 = scmp.ne.s32.totalorder %s98, %s101
      %p107 = scmp.eq.s32.totalorder %s22, 0
      %p108 = por %p106, %p107
      %p109 = scmp.ne.s32.totalorder %s98, %s101
      %p110 = scmp.eq.s32.totalorder %s27, 7
      %p111 = por %p109, %p110
      %p112 = scmp.ne.s32.totalorder %s101, %s102
      %p113 = scmp.eq.s32.totalorder %s27, 0
      %p114 = por %p112, %p113
      %p115 = scmp.ne.s32.totalorder %s101, %s102
      %p116 = scmp.eq.s32.totalorder %s28, 7
      %p117 = por %p115, %p116
      %p119 = scmp.ne.s32.totalorder %s102, %s118
      %p120 = scmp.eq.s32.totalorder %s28, 0
      %p121 = por %p119, %p120
      %s122 = ssub.s32 %s29, %s41
      %p123 = scmp.eq.s32.totalorder %s122, 0
      %s125 = sadd.s32 %s124, 1
      %s126 = scalar_select %p123, %s124, %s125
      %p129 = pneg %p123
      %p130 = scmp.eq.s32.totalorder %s22, 7
      %p131 = por %p129, %p130
      %p132 = scmp.ne.s32.totalorder %s124, %s127
      %p133 = scmp.eq.s32.totalorder %s22, 0
      %p134 = por %p132, %p133
      %p135 = scmp.ne.s32.totalorder %s124, %s127
      %p136 = scmp.eq.s32.totalorder %s27, 7
      %p137 = por %p135, %p136
      %p138 = scmp.ne.s32.totalorder %s127, %s128
      %p139 = scmp.eq.s32.totalorder %s27, 0
      %p140 = por %p138, %p139
      %p141 = scmp.ne.s32.totalorder %s127, %s128
      %p142 = scmp.eq.s32.totalorder %s28, 7
      %p143 = por %p141, %p142
      %p145 = scmp.ne.s32.totalorder %s128, %s144
      %p146 = scmp.eq.s32.totalorder %s28, 0
      %p147 = por %p145, %p146
      %s149 = sadd.s32 %s148, 1
      %p152 = scmp.eq.s32.totalorder %s22, 7
      %p153 = scmp.ne.s32.totalorder %s148, %s150
      %p154 = scmp.eq.s32.totalorder %s22, 0
      %p155 = por %p153, %p154
      %p156 = scmp.ne.s32.totalorder %s148, %s150
      %p157 = scmp.eq.s32.totalorder %s27, 7
      %p158 = por %p156, %p157
      %p159 = scmp.ne.s32.totalorder %s150, %s151
      %p160 = scmp.eq.s32.totalorder %s27, 0
      %p161 = por %p159, %p160
      %p162 = scmp.ne.s32.totalorder %s150, %s151
      %p163 = scmp.eq.s32.totalorder %s28, 7
      %p164 = por %p162, %p163
      %p166 = scmp.ne.s32.totalorder %s151, %s165
      %p167 = scmp.eq.s32.totalorder %s28, 0
      %p168 = por %p166, %p167
      %s169 = ssub.s32 %s29, %s41
      %s170 = ssub.s32 %s30, %s37
      %s171 = sor.u32 %s169, %s170
      %p172 = scmp.eq.s32.totalorder %s171, 0
      %s174 = sadd.s32 %s173, 1
      %s175 = scalar_select %p172, %s173, %s174
      %p178 = pneg %p172
      %p179 = scmp.eq.s32.totalorder %s22, 7
      %p180 = por %p178, %p179
      %p181 = scmp.ne.s32.totalorder %s173, %s176
      %p182 = scmp.eq.s32.totalorder %s22, 0
      %p183 = por %p181, %p182
      %p184 = scmp.ne.s32.totalorder %s173, %s176
      %p185 = scmp.eq.s32.totalorder %s27, 7
      %p186 = por %p184, %p185
      %p187 = scmp.ne.s32.totalorder %s176, %s177
      %p188 = scmp.eq.s32.totalorder %s27, 0
      %p189 = por %p187, %p188
      %p190 = scmp.ne.s32.totalorder %s176, %s177
      %p191 = scmp.eq.s32.totalorder %s28, 7
      %p192 = por %p190, %p191
      %p194 = scmp.ne.s32.totalorder %s177, %s193
      %p195 = scmp.eq.s32.totalorder %s28, 0
      %p196 = por %p194, %p195
      %s197 = ssub.s32 %s29, %s41
      %s198 = ssub.s32 %s30, %s37
      %s199 = sor.u32 %s197, %s198
      %p200 = scmp.eq.s32.totalorder %s199, 0
      %s202 = sadd.s32 %s201, 1
      %s203 = scalar_select %p200, %s201, %s202
      %p206 = pneg %p200
      %p207 = scmp.eq.s32.totalorder %s22, 7
      %p208 = por %p206, %p207
      %p209 = scmp.ne.s32.totalorder %s201, %s204
      %p210 = scmp.eq.s32.totalorder %s22, 0
      %p211 = por %p209, %p210
      %p212 = scmp.ne.s32.totalorder %s201, %s204
      %p213 = scmp.eq.s32.totalorder %s27, 7
      %p214 = por %p212, %p213
      %p215 = scmp.ne.s32.totalorder %s204, %s205
      %p216 = scmp.eq.s32.totalorder %s27, 0
      %p217 = por %p215, %p216
      %p218 = scmp.ne.s32.totalorder %s204, %s205
      %p219 = scmp.eq.s32.totalorder %s28, 7
      %p220 = por %p218, %p219
      %p222 = scmp.ne.s32.totalorder %s205, %s221
      %p223 = scmp.eq.s32.totalorder %s28, 0
      %p224 = por %p222, %p223
      %p225 = scmp.le.s32.totalorder 1, %s22
      %p226 = scmp.lt.s32.totalorder %s22, 9
      %p227 = pnand %p225, %p226
      %p228 = pneg %p227
      // Predicated region
      $region9: #{tpu_custom_call.1} parent=5 // pred_check
        _
      $region10: #{tpu_custom_call.1} parent=5 // pred_check_branch
        %230 = sbr.rel (%p227) target = $region12
      $region11: #{tpu_custom_call.1} parent=5 // pred_region
        %s231 = ssub.s32 %s22, 1
        // Predicated region
        $region13: #{tpu_custom_call.1} parent=11 // pred_check
          %p232 = pneg %p161
        $region14: #{tpu_custom_call.1} parent=11 // pred_check_branch
          %234 = sbr.rel (%p232) target = $region16
        $region15: #{tpu_custom_call.1} parent=11 // pred_region
          %s236 = ssub.s32 16, 16
          %237 = vsyncadd [#allocation6], %s236
          %s239 = sshll.u32 [#allocation7], 4
          %s240 = int_to_ptr.vmem [resolvable:$true] %s239
          %242 = dma.hbm_to_vmem [thread:$0]  %s4, 16, %s240, [#allocation6]
        $region16: #{tpu_custom_call.1} parent=11 // pred_fallthru
          _
      $region12: #{tpu_custom_call.1} parent=5 // pred_fallthru
        _
      %p243 = scmp.lt.s32.totalorder %s22, 8
      // Predicated region
      $region17: #{tpu_custom_call.1} parent=5 // pred_check
        %p244 = pneg %p243
      $region18: #{tpu_custom_call.1} parent=5 // pred_check_branch
        %246 = sbr.rel (%p244) target = $region20
      $region19: #{tpu_custom_call.1} parent=5 // pred_region
        // Predicated region
        $region21: #{tpu_custom_call.1} parent=19 // pred_check
          %p247 = pneg %p56
        $region22: #{tpu_custom_call.1} parent=19 // pred_check_branch
          %249 = sbr.rel (%p247) target = $region24
        $region23: #{tpu_custom_call.1} parent=19 // pred_region
          %s250 = smul.u32 16, %s30
          %p251 = scmp.lt.s32.totalorder %s29, 1
          %s252 = scalar_select %p251, %s29, 1
          %p253 = scmp.lt.s32.totalorder %s250, 63
          %s254 = scalar_select %p253, %s250, 63
          %s255 = smul.addr %s252, 64
          %s256 = sadd.s32 %s254, %s255
          %s257 = smul.addr %s256, 8
          %s258 = scalar_lea.vmem %s0, %s257
          %s259 = smul.u32 16, %s30
        $region24: #{tpu_custom_call.1} parent=19 // pred_fallthru
          _
        // Predicated region
        $region25: #{tpu_custom_call.1} parent=19 // pred_check
          %p260 = pneg %p82
        $region26: #{tpu_custom_call.1} parent=19 // pred_check_branch
          %262 = sbr.rel (%p260) target = $region28
        $region27: #{tpu_custom_call.1} parent=19 // pred_region
          %s263 = sand.u32 %s72, 1
          %s264 = scalar_lea.sflag [#allocation3], %s263
          %s265 = sand.u32 %s72, 1
          %s266 = smul.addr %s265, 96
          %s267 = scalar_lea.vmem [#allocation2], %s266
          %s269 = ssub.s32 1536, 1536
          %270 = vsyncadd %s264, %s269
          %s271 = smul.addr %s29, 12
          %s272 = smul.addr %s271, 128
          %s273 = scalar_lea.hbm %s1, %s272
          %s274 = sshll.u32 %s267, 4
          %s275 = int_to_ptr.vmem [resolvable:$true] %s274
          %280 = dma.hbm_to_vmem [thread:$0]  %s273, 1536, %s275, %s264, 768, 768, 48
        $region28: #{tpu_custom_call.1} parent=19 // pred_fallthru
          _
        // Predicated region
        $region29: #{tpu_custom_call.1} parent=19 // pred_check
          %p281 = pneg %p108
        $region30: #{tpu_custom_call.1} parent=19 // pred_check_branch
          %283 = sbr.rel (%p281) target = $region32
        $region31: #{tpu_custom_call.1} parent=19 // pred_region
          %s284 = sand.u32 %s22, 1
          %s285 = scalar_lea.sflag [#allocation6], %s284
          %s286 = sand.u32 %s98, 1
          %s287 = smul.addr %s286, 6
          %s288 = scalar_lea.vmem [#allocation5], %s287
          %s290 = ssub.s32 96, 96
          %291 = vsyncadd %s285, %s290
          %s292 = smul.addr %s29, 6
          %s293 = smul.addr %s292, 16
          %s294 = scalar_lea.hbm %s2, %s293
          %s296 = sshll.u32 %s288, 4
          %s297 = int_to_ptr.vmem [resolvable:$true] %s296
          %299 = dma.hbm_to_vmem [thread:$0]  %s294, 96, %s297, %s285
        $region32: #{tpu_custom_call.1} parent=19 // pred_fallthru
          _
        // Predicated region
        $region33: #{tpu_custom_call.1} parent=19 // pred_check
          %p300 = pneg %p134
        $region34: #{tpu_custom_call.1} parent=19 // pred_check_branch
          %302 = sbr.rel (%p300) target = $region36
        $region35: #{tpu_custom_call.1} parent=19 // pred_region
          %p303 = scmp.lt.s32.totalorder %s29, 1
          %s304 = scalar_select %p303, %s29, 1
          %s305 = smul.addr %s304, 96
          %s306 = smul.addr %s305, 8
          %s307 = scalar_lea.vmem %s3, %s306
        $region36: #{tpu_custom_call.1} parent=19 // pred_fallthru
          _
      $region20: #{tpu_custom_call.1} parent=5 // pred_fallthru
        _
      %p308 = scmp.le.s32.totalorder 1, %s22
      %p309 = scmp.lt.s32.totalorder %s22, 9
      %p310 = pnand %p308, %p309
      %p311 = pneg %p310
      // Predicated region
      $region37: #{tpu_custom_call.1} parent=5 // pred_check
        _
      $region38: #{tpu_custom_call.1} parent=5 // pred_check_branch
        %313 = sbr.rel (%p310) target = $region40
      $region39: #{tpu_custom_call.1} parent=5 // pred_region
        %s314 = ssub.s32 %s22, 1
        %s315 = sand.u32 %s75, 1
        %s316 = scalar_lea.sflag [#allocation3], %s315
        %s317 = sand.u32 %s75, 1
        %s318 = smul.addr %s317, 96
        %s319 = scalar_lea.vmem [#allocation2], %s318
        // Predicated region
        $region41: #{tpu_custom_call.1} parent=39 // pred_check
          %p320 = pneg %p88
        $region42: #{tpu_custom_call.1} parent=39 // pred_check_branch
          %322 = sbr.rel (%p320) target = $region44
        $region43: #{tpu_custom_call.1} parent=39 // pred_region
          %323 = dma.done %s316, 1536
        $region44: #{tpu_custom_call.1} parent=39 // pred_fallthru
          _
        %s324 = sand.u32 %s27, 1
        %s325 = scalar_lea.sflag [#allocation6], %s324
        %s326 = sand.u32 %s101, 1
        %s327 = smul.addr %s326, 6
        %s328 = scalar_lea.vmem [#allocation5], %s327
        // Predicated region
        $region45: #{tpu_custom_call.1} parent=39 // pred_check
          %p329 = pneg %p114
        $region46: #{tpu_custom_call.1} parent=39 // pred_check_branch
          %331 = sbr.rel (%p329) target = $region48
        $region47: #{tpu_custom_call.1} parent=39 // pred_region
          %332 = dma.done %s325, 96
        $region48: #{tpu_custom_call.1} parent=39 // pred_fallthru
          _
        // Predicated region
        $region49: #{tpu_custom_call.1} parent=39 // pred_check
          %p333 = pneg %p161
        $region50: #{tpu_custom_call.1} parent=39 // pred_check_branch
          %335 = sbr.rel (%p333) target = $region52
        $region51: #{tpu_custom_call.1} parent=39 // pred_region
          %336 = dma.done [#allocation6], 16
        $region52: #{tpu_custom_call.1} parent=39 // pred_fallthru
          _
        %s337 = smul.u32 16, %s32
        %p338 = scmp.lt.s32.totalorder %s31, 1
        %s339 = scalar_select %p338, %s31, 1
        %p340 = scmp.lt.s32.totalorder %s337, 63
        %s341 = scalar_select %p340, %s337, 63
        %s342 = smul.addr %s339, 64
        %s343 = sadd.s32 %s341, %s342
        %s344 = smul.addr %s343, 8
        %s345 = scalar_lea.vmem %s0, %s344
        %p346 = pneg %p62
        %p347 = pneg %p59
        %s348 = sand.u32 %s75, 1
        %s349 = scalar_lea.sflag [#allocation3], %s348
        %s350 = sand.u32 %s75, 1
        %s351 = smul.addr %s350, 96
        %s352 = scalar_lea.vmem [#allocation2], %s351
        %p353 = pneg %p88
        %p354 = pneg %p85
        %s355 = sand.u32 %s27, 1
        %s356 = scalar_lea.sflag [#allocation6], %s355
        %s357 = sand.u32 %s101, 1
        %s358 = smul.addr %s357, 6
        %s359 = scalar_lea.vmem [#allocation5], %s358
        %p360 = pneg %p114
        %p361 = pneg %p111
        %p362 = scmp.lt.s32.totalorder %s31, 1
        %s363 = scalar_select %p362, %s31, 1
        %s364 = smul.addr %s363, 96
        %s365 = smul.addr %s364, 8
        %s366 = scalar_lea.vmem %s3, %s365
        %p367 = pneg %p140
        %p368 = pneg %p137
        %p369 = pneg %p161
        %p370 = pneg %p158
        %p371 = pneg %p189
        %p372 = pneg %p186
        %s373 = smul.u32 16, %s32
        %p374 = scmp.lt.s32.totalorder %s31, 1
        %s375 = scalar_select %p374, %s31, 1
        %p376 = scmp.lt.s32.totalorder %s373, 63
        %s377 = scalar_select %p376, %s373, 63
        %s378 = smul.addr %s375, 64
        %s379 = sadd.s32 %s377, %s378
        %s380 = smul.addr %s379, 8
        %s381 = scalar_lea.vmem %s5, %s380
        %p382 = pneg %p217
        %p383 = pneg %p214
        %s384 = sand.u32 %s204, 1
        %s385 = scalar_lea.sflag [#allocation4], %s384
        %s386 = sand.u32 %s204, 1
        %s387 = smul.addr %s386, 768
        %s388 = scalar_lea.vmem [#allocation8], %s387
        %s389 = smul.u32 16, %s32
        %p390 = scmp.lt.s32.totalorder %s31, 1
        %s391 = scalar_select %p390, %s31, 1
        %p392 = scmp.lt.s32.totalorder %s389, 63
        %s393 = scalar_select %p392, %s389, 63
        %s394 = smul.addr %s391, 64
        %s395 = sadd.s32 %s393, %s394
        %s396 = smul.addr %s395, 8
        %s397 = scalar_lea.vmem %s0, %s396
        %s398 = smul.u32 16, %s32
        %p399 = scmp.lt.s32.totalorder %s31, 1
        %s400 = scalar_select %p399, %s31, 1
        %s401 = smul.addr %s400, 96
        %s402 = smul.addr %s401, 8
        %s403 = scalar_lea.vmem %s3, %s402
        %s404 = smul.u32 16, %s32
        %p405 = scmp.lt.s32.totalorder %s31, 1
        %s406 = scalar_select %p405, %s31, 1
        %p407 = scmp.lt.s32.totalorder %s404, 63
        %s408 = scalar_select %p407, %s404, 63
        %s409 = smul.addr %s406, 64
        %s410 = sadd.s32 %s408, %s409
        %s411 = smul.addr %s410, 8
        %s412 = scalar_lea.vmem %s5, %s411
        %s413 = smul.u32 16, %s32
        %s414 = smul.u32 16, %s32
        %v415 = vld [vmem:[%s397] sm:$0xff]
        %v416 = vld [vmem:[%s397 + $0x8] sm:$0xff]
        %v417 = vld [vmem:[%s397 + $0x10] sm:$0xff]
        %v418 = vld [vmem:[%s397 + $0x18] sm:$0xff]
        %v419 = vld [vmem:[%s397 + $0x20] sm:$0xff]
        %v420 = vld [vmem:[%s397 + $0x28] sm:$0xff]
        %v421 = vld [vmem:[%s397 + $0x30] sm:$0xff]
        %v422 = vld [vmem:[%s397 + $0x38] sm:$0xff]
        %v423 = vld [vmem:[%s397 + $0x40] sm:$0xff]
        %v424 = vld [vmem:[%s397 + $0x48] sm:$0xff]
        %v425 = vld [vmem:[%s397 + $0x50] sm:$0xff]
        %v426 = vld [vmem:[%s397 + $0x58] sm:$0xff]
        %v427 = vld [vmem:[%s397 + $0x60] sm:$0xff]
        %v428 = vld [vmem:[%s397 + $0x68] sm:$0xff]
        %v429 = vld [vmem:[%s397 + $0x70] sm:$0xff]
        %v430 = vld [vmem:[%s397 + $0x78] sm:$0xff]
        %v431 = vld [vmem:[%s319] sm:$0xff]
        %v432 = vld [vmem:[%s319 + $0x8] sm:$0xff]
        %v433 = vld [vmem:[%s319 + $0x10] sm:$0xff]
        %v434 = vld [vmem:[%s319 + $0x18] sm:$0xff]
        %v435 = vld [vmem:[%s319 + $0x20] sm:$0xff]
        %v436 = vld [vmem:[%s319 + $0x28] sm:$0xff]
        %v437 = vld [vmem:[%s319 + $0x30] sm:$0xff]
        %v438 = vld [vmem:[%s319 + $0x38] sm:$0xff]
        %v439 = vld [vmem:[%s319 + $0x40] sm:$0xff]
        %v440 = vld [vmem:[%s319 + $0x48] sm:$0xff]
        %v441 = vld [vmem:[%s319 + $0x50] sm:$0xff]
        %v442 = vld [vmem:[%s319 + $0x58] sm:$0xff]
        %v443 = vld [vmem:[%s328] sm:$0x3f]
        %v445 = vlaneseq
        %v446 = vshrl.u32 %v445, 7
        %v447 = vsub.s32 0, %v446
        %v448 = vrot.slane %v443, %v447
        %v449 = vlaneseq
        %v450 = vshrl.u32 %v449, 7
        %v451 = vsub.s32 1, %v450
        %v452 = vrot.slane %v443, %v451
        %v453 = vlaneseq
        %v454 = vshrl.u32 %v453, 7
        %v455 = vsub.s32 2, %v454
        %v456 = vrot.slane %v443, %v455
        %v457 = vlaneseq
        %v458 = vshrl.u32 %v457, 7
        %v459 = vsub.s32 3, %v458
        %v460 = vrot.slane %v443, %v459
        %v461 = vlaneseq
        %v462 = vshrl.u32 %v461, 7
        %v463 = vsub.s32 4, %v462
        %v464 = vrot.slane %v443, %v463
        %v465 = vlaneseq
        %v466 = vshrl.u32 %v465, 7
        %v467 = vsub.s32 5, %v466
        %v468 = vrot.slane %v443, %v467
        %vm475 = vcmask 130048
        %v477 = vsel %vm475, %v415, 0
        %v480 = vsel %vm475, %v416, 0
        %v483 = vsel %vm475, %v417, 0
        %v486 = vsel %vm475, %v418, 0
        %v489 = vsel %vm475, %v419, 0
        %v492 = vsel %vm475, %v420, 0
        %v495 = vsel %vm475, %v421, 0
        %v498 = vsel %vm475, %v422, 0
        %v501 = vsel %vm475, %v423, 0
        %v504 = vsel %vm475, %v424, 0
        %v507 = vsel %vm475, %v425, 0
        %v510 = vsel %vm475, %v426, 0
        %v513 = vsel %vm475, %v427, 0
        %v516 = vsel %vm475, %v428, 0
        %v519 = vsel %vm475, %v429, 0
        %v522 = vsel %vm475, %v430, 0
        %524 = vmatprep.subr.mxu0 %v432
        %525 = vmatpush1.msra.mxu0 %v431
        %526 = vmatprep.subr.mxu0 %v438
        %527 = vmatpush1.msra.mxu0 %v437
        %528 = vmatprep.subr.mxu0 0.0
        %529 = vmatpush1.msra.mxu0 0.0
        %530 = vmatprep.subr.mxu0 0.0
        %531 = vmatpush1.msra.mxu0 0.0
        %532 = vmatprep.subr.mxu0 0.0
        %533 = vmatpush1.msra.mxu0 0.0
        %534 = vmatprep.subr.mxu0 0.0
        %535 = vmatpush1.msra.mxu0 0.0
        %536 = vmatprep.subr.mxu0 0.0
        %537 = vmatpush1.msra.mxu0 0.0
        %538 = vmatprep.subr.mxu0 0.0
        %539 = vmatpush1.msra.mxu0 0.0
        %540 = vmatprep.subr.mxu0 0.0
        %541 = vmatpush1.msra.mxu0 0.0
        %542 = vmatprep.subr.mxu0 0.0
        %543 = vmatpush1.msra.mxu0 0.0
        %544 = vmatprep.subr.mxu0 0.0
        %545 = vmatpush1.msra.mxu0 0.0
        %546 = vmatprep.subr.mxu0 0.0
        %547 = vmatpush1.msra.mxu0 0.0
        %548 = vmatprep.subr.mxu0 0.0
        %549 = vmatpush1.msra.mxu0 0.0
        %550 = vmatprep.subr.mxu0 0.0
        %551 = vmatpush1.msra.mxu0 0.0
        %552 = vmatprep.subr.mxu0 0.0
        %553 = vmatpush1.msra.mxu0 0.0
        %554 = vmatprep.subr.mxu0 0.0
        %555 = vmatpush1.msra.mxu0 0.0
        %556 = vmatprep.subr.mxu0 0.0
        %557 = vmatpush1.msra.mxu0 0.0
        %558 = vmatprep.subr.mxu0 0.0
        %559 = vmatpush1.msra.mxu0 0.0
        %560 = vmatprep.subr.mxu0 0.0
        %561 = vmatpush1.msra.mxu0 0.0
        %562 = vmatprep.subr.mxu0 0.0
        %563 = vmatpush1.msra.mxu0 0.0
        %564 = vmatprep.subr.mxu0 0.0
        %565 = vmatpush1.msra.mxu0 0.0
        %566 = vmatprep.subr.mxu0 0.0
        %567 = vmatpush1.msra.mxu0 0.0
        %568 = vmatprep.subr.mxu0 0.0
        %569 = vmatpush1.msra.mxu0 0.0
        %570 = vmatprep.subr.mxu0 0.0
        %571 = vmatpush1.msra.mxu0 0.0
        %572 = vmatprep.subr.mxu0 0.0
        %573 = vmatpush1.msra.mxu0 0.0
        %574 = vmatprep.subr.mxu0 0.0
        %575 = vmatpush1.msra.mxu0 0.0
        %576 = vmatprep.subr.mxu0 0.0
        %577 = vmatpush1.msra.mxu0 0.0
        %578 = vmatprep.subr.mxu0 0.0
        %579 = vmatpush1.msra.mxu0 0.0
        %580 = vmatprep.subr.mxu0 0.0
        %581 = vmatpush1.msra.mxu0 0.0
        %582 = vmatprep.subr.mxu0 0.0
        %583 = vmatpush1.msra.mxu0 0.0
        %584 = vmatprep.subr.mxu0 0.0
        %585 = vmatpush1.msra.mxu0 0.0
        %586 = vmatprep.subr.mxu0 0.0
        %587 = vmatpush1.msra.mxu0 0.0
        %588 = vmatprep.mubr.f32.mxu0 0.0
        %589 = vmatmul.mubr.f32.gmra.mrb[0].mxu0 %v477
        %v590 = vpop.f32.mrb[0].mxu0
        %v591 = vadd.f32 %v448, %v590
        %v592 = vpop.f32.mrb[0].mxu0
        %v593 = vadd.f32 %v452, %v592
        %594 = vmatprep.mubr.f32.mxu0 0.0
        %595 = vmatmul.mubr.f32.gmra.mrb[0].mxu0 %v480
        %v596 = vpop.f32.mrb[0].mxu0
        %v597 = vadd.f32 %v448, %v596
        %v598 = vpop.f32.mrb[0].mxu0
        %v599 = vadd.f32 %v452, %v598
        %600 = vmatprep.mubr.f32.mxu0 0.0
        %601 = vmatmul.mubr.f32.gmra.mrb[0].mxu0 %v483
        %v602 = vpop.f32.mrb[0].mxu0
        %v603 = vadd.f32 %v448, %v602
        %v604 = vpop.f32.mrb[0].mxu0
        %v605 = vadd.f32 %v452, %v604
        %606 = vmatprep.mubr.f32.mxu0 0.0
        %607 = vmatmul.mubr.f32.gmra.mrb[0].mxu0 %v486
        %v608 = vpop.f32.mrb[0].mxu0
        %v609 = vadd.f32 %v448, %v608
        %v610 = vpop.f32.mrb[0].mxu0
        %v611 = vadd.f32 %v452, %v610
        %612 = vmatprep.mubr.f32.mxu0 0.0
        %613 = vmatmul.mubr.f32.gmra.mrb[0].mxu0 %v489
        %v614 = vpop.f32.mrb[0].mxu0
        %v615 = vadd.f32 %v448, %v614
        %v616 = vpop.f32.mrb[0].mxu0
        %v617 = vadd.f32 %v452, %v616
        %618 = vmatprep.mubr.f32.mxu0 0.0
        %619 = vmatmul.mubr.f32.gmra.mrb[0].mxu0 %v492
        %v620 = vpop.f32.mrb[0].mxu0
        %v621 = vadd.f32 %v448, %v620
        %v622 = vpop.f32.mrb[0].mxu0
        %v623 = vadd.f32 %v452, %v622
        %624 = vmatprep.mubr.f32.mxu0 0.0
        %625 = vmatmul.mubr.f32.gmra.mrb[0].mxu0 %v495
        %v626 = vpop.f32.mrb[0].mxu0
        %v627 = vadd.f32 %v448, %v626
        %v628 = vpop.f32.mrb[0].mxu0
        %v629 = vadd.f32 %v452, %v628
        %630 = vmatprep.mubr.f32.mxu0 0.0
        %631 = vmatmul.mubr.f32.gmra.mrb[0].mxu0 %v498
        %v632 = vpop.f32.mrb[0].mxu0
        %v633 = vadd.f32 %v448, %v632
        %v634 = vpop.f32.mrb[0].mxu0
        %v635 = vadd.f32 %v452, %v634
        %636 = vmatprep.mubr.f32.mxu0 0.0
        %637 = vmatmul.mubr.f32.gmra.mrb[0].mxu0 %v501
        %v638 = vpop.f32.mrb[0].mxu0
        %v639 = vadd.f32 %v448, %v638
        %v640 = vpop.f32.mrb[0].mxu0
        %v641 = vadd.f32 %v452, %v640
        %642 = vmatprep.mubr.f32.mxu0 0.0
        %643 = vmatmul.mubr.f32.gmra.mrb[0].mxu0 %v504
        %v644 = vpop.f32.mrb[0].mxu0
        %v645 = vadd.f32 %v448, %v644
        %v646 = vpop.f32.mrb[0].mxu0
        %v647 = vadd.f32 %v452, %v646
        %648 = vmatprep.mubr.f32.mxu0 0.0
        %649 = vmatmul.mubr.f32.gmra.mrb[0].mxu0 %v507
        %v650 = vpop.f32.mrb[0].mxu0
        %v651 = vadd.f32 %v448, %v650
        %v652 = vpop.f32.mrb[0].mxu0
        %v653 = vadd.f32 %v452, %v652
        %654 = vmatprep.mubr.f32.mxu0 0.0
        %655 = vmatmul.mubr.f32.gmra.mrb[0].mxu0 %v510
        %v656 = vpop.f32.mrb[0].mxu0
        %v657 = vadd.f32 %v448, %v656
        %v658 = vpop.f32.mrb[0].mxu0
        %v659 = vadd.f32 %v452, %v658
        %660 = vmatprep.mubr.f32.mxu0 0.0
        %661 = vmatmul.mubr.f32.gmra.mrb[0].mxu0 %v513
        %v662 = vpop.f32.mrb[0].mxu0
        %v663 = vadd.f32 %v448, %v662
        %v664 = vpop.f32.mrb[0].mxu0
        %v665 = vadd.f32 %v452, %v664
        %666 = vmatprep.mubr.f32.mxu0 0.0
        %667 = vmatmul.mubr.f32.gmra.mrb[0].mxu0 %v516
        %v668 = vpop.f32.mrb[0].mxu0
        %v669 = vadd.f32 %v448, %v668
        %v670 = vpop.f32.mrb[0].mxu0
        %v671 = vadd.f32 %v452, %v670
        %672 = vmatprep.mubr.f32.mxu0 0.0
        %673 = vmatmul.mubr.f32.gmra.mrb[0].mxu0 %v519
        %v674 = vpop.f32.mrb[0].mxu0
        %v675 = vadd.f32 %v448, %v674
        %v676 = vpop.f32.mrb[0].mxu0
        %v677 = vadd.f32 %v452, %v676
        %678 = vmatprep.mubr.f32.mxu0 0.0
        %679 = vmatmul.mubr.f32.gmra.mrb[0].mxu0 %v522
        %v680 = vpop.f32.mrb[0].mxu0
        %v681 = vadd.f32 %v448, %v680
        %v682 = vpop.f32.mrb[0].mxu0
        %v683 = vadd.f32 %v452, %v682
        %684 = vdwg.mxu0
        %685 = vmatprep.subr.mxu0 %v434
        %686 = vmatpush1.msra.mxu0 %v433
        %687 = vmatprep.subr.mxu0 %v440
        %688 = vmatpush1.msra.mxu0 %v439
        %689 = vmatprep.subr.mxu0 0.0
        %690 = vmatpush1.msra.mxu0 0.0
        %691 = vmatprep.subr.mxu0 0.0
        %692 = vmatpush1.msra.mxu0 0.0
        %693 = vmatprep.subr.mxu0 0.0
        %694 = vmatpush1.msra.mxu0 0.0
        %695 = vmatprep.subr.mxu0 0.0
        %696 = vmatpush1.msra.mxu0 0.0
        %697 = vmatprep.subr.mxu0 0.0
        %698 = vmatpush1.msra.mxu0 0.0
        %699 = vmatprep.subr.mxu0 0.0
        %700 = vmatpush1.msra.mxu0 0.0
        %701 = vmatprep.subr.mxu0 0.0
        %702 = vmatpush1.msra.mxu0 0.0
        %703 = vmatprep.subr.mxu0 0.0
        %704 = vmatpush1.msra.mxu0 0.0
        %705 = vmatprep.subr.mxu0 0.0
        %706 = vmatpush1.msra.mxu0 0.0
        %707 = vmatprep.subr.mxu0 0.0
        %708 = vmatpush1.msra.mxu0 0.0
        %709 = vmatprep.subr.mxu0 0.0
        %710 = vmatpush1.msra.mxu0 0.0
        %711 = vmatprep.subr.mxu0 0.0
        %712 = vmatpush1.msra.mxu0 0.0
        %713 = vmatprep.subr.mxu0 0.0
        %714 = vmatpush1.msra.mxu0 0.0
        %715 = vmatprep.subr.mxu0 0.0
        %716 = vmatpush1.msra.mxu0 0.0
        %717 = vmatprep.subr.mxu0 0.0
        %718 = vmatpush1.msra.mxu0 0.0
        %719 = vmatprep.subr.mxu0 0.0
        %720 = vmatpush1.msra.mxu0 0.0
        %721 = vmatprep.subr.mxu0 0.0
        %722 = vmatpush1.msra.mxu0 0.0
        %723 = vmatprep.subr.mxu0 0.0
        %724 = vmatpush1.msra.mxu0 0.0
        %725 = vmatprep.subr.mxu0 0.0
        %726 = vmatpush1.msra.mxu0 0.0
        %727 = vmatprep.subr.mxu0 0.0
        %728 = vmatpush1.msra.mxu0 0.0
        %729 = vmatprep.subr.mxu0 0.0
        %730 = vmatpush1.msra.mxu0 0.0
        %731 = vmatprep.subr.mxu0 0.0
        %732 = vmatpush1.msra.mxu0 0.0
        %733 = vmatprep.subr.mxu0 0.0
        %734 = vmatpush1.msra.mxu0 0.0
        %735 = vmatprep.subr.mxu0 0.0
        %736 = vmatpush1.msra.mxu0 0.0
        %737 = vmatprep.subr.mxu0 0.0
        %738 = vmatpush1.msra.mxu0 0.0
        %739 = vmatprep.subr.mxu0 0.0
        %740 = vmatpush1.msra.mxu0 0.0
        %741 = vmatprep.subr.mxu0 0.0
        %742 = vmatpush1.msra.mxu0 0.0
        %743 = vmatprep.subr.mxu0 0.0
        %744 = vmatpush1.msra.mxu0 0.0
        %745 = vmatprep.subr.mxu0 0.0
        %746 = vmatpush1.msra.mxu0 0.0
        %747 = vmatprep.subr.mxu0 0.0
        %748 = vmatpush1.msra.mxu0 0.0
        %749 = vmatprep.mubr.f32.mxu0 0.0
        %750 = vmatmul.mubr.f32.gmra.mrb[0].mxu0 %v477
        %v751 = vpop.f32.mrb[0].mxu0
        %v752 = vadd.f32 %v456, %v751
        %v753 = vpop.f32.mrb[0].mxu0
        %v754 = vadd.f32 %v460, %v753
        %755 = vmatprep.mubr.f32.mxu0 0.0
        %756 = vmatmul.mubr.f32.gmra.mrb[0].mxu0 %v480
        %v757 = vpop.f32.mrb[0].mxu0
        %v758 = vadd.f32 %v456, %v757
        %v759 = vpop.f32.mrb[0].mxu0
        %v760 = vadd.f32 %v460, %v759
        %761 = vmatprep.mubr.f32.mxu0 0.0
        %762 = vmatmul.mubr.f32.gmra.mrb[0].mxu0 %v483
        %v763 = vpop.f32.mrb[0].mxu0
        %v764 = vadd.f32 %v456, %v763
        %v765 = vpop.f32.mrb[0].mxu0
        %v766 = vadd.f32 %v460, %v765
        %767 = vmatprep.mubr.f32.mxu0 0.0
        %768 = vmatmul.mubr.f32.gmra.mrb[0].mxu0 %v486
        %v769 = vpop.f32.mrb[0].mxu0
        %v770 = vadd.f32 %v456, %v769
        %v771 = vpop.f32.mrb[0].mxu0
        %v772 = vadd.f32 %v460, %v771
        %773 = vmatprep.mubr.f32.mxu0 0.0
        %774 = vmatmul.mubr.f32.gmra.mrb[0].mxu0 %v489
        %v775 = vpop.f32.mrb[0].mxu0
        %v776 = vadd.f32 %v456, %v775
        %v777 = vpop.f32.mrb[0].mxu0
        %v778 = vadd.f32 %v460, %v777
        %779 = vmatprep.mubr.f32.mxu0 0.0
        %780 = vmatmul.mubr.f32.gmra.mrb[0].mxu0 %v492
        %v781 = vpop.f32.mrb[0].mxu0
        %v782 = vadd.f32 %v456, %v781
        %v783 = vpop.f32.mrb[0].mxu0
        %v784 = vadd.f32 %v460, %v783
        %785 = vmatprep.mubr.f32.mxu0 0.0
        %786 = vmatmul.mubr.f32.gmra.mrb[0].mxu0 %v495
        %v787 = vpop.f32.mrb[0].mxu0
        %v788 = vadd.f32 %v456, %v787
        %v789 = vpop.f32.mrb[0].mxu0
        %v790 = vadd.f32 %v460, %v789
        %791 = vmatprep.mubr.f32.mxu0 0.0
        %792 = vmatmul.mubr.f32.gmra.mrb[0].mxu0 %v498
        %v793 = vpop.f32.mrb[0].mxu0
        %v794 = vadd.f32 %v456, %v793
        %v795 = vpop.f32.mrb[0].mxu0
        %v796 = vadd.f32 %v460, %v795
        %797 = vmatprep.mubr.f32.mxu0 0.0
        %798 = vmatmul.mubr.f32.gmra.mrb[0].mxu0 %v501
        %v799 = vpop.f32.mrb[0].mxu0
        %v800 = vadd.f32 %v456, %v799
        %v801 = vpop.f32.mrb[0].mxu0
        %v802 = vadd.f32 %v460, %v801
        %803 = vmatprep.mubr.f32.mxu0 0.0
        %804 = vmatmul.mubr.f32.gmra.mrb[0].mxu0 %v504
        %v805 = vpop.f32.mrb[0].mxu0
        %v806 = vadd.f32 %v456, %v805
        %v807 = vpop.f32.mrb[0].mxu0
        %v808 = vadd.f32 %v460, %v807
        %809 = vmatprep.mubr.f32.mxu0 0.0
        %810 = vmatmul.mubr.f32.gmra.mrb[0].mxu0 %v507
        %v811 = vpop.f32.mrb[0].mxu0
        %v812 = vadd.f32 %v456, %v811
        %v813 = vpop.f32.mrb[0].mxu0
        %v814 = vadd.f32 %v460, %v813
        %815 = vmatprep.mubr.f32.mxu0 0.0
        %816 = vmatmul.mubr.f32.gmra.mrb[0].mxu0 %v510
        %v817 = vpop.f32.mrb[0].mxu0
        %v818 = vadd.f32 %v456, %v817
        %v819 = vpop.f32.mrb[0].mxu0
        %v820 = vadd.f32 %v460, %v819
        %821 = vmatprep.mubr.f32.mxu0 0.0
        %822 = vmatmul.mubr.f32.gmra.mrb[0].mxu0 %v513
        %v823 = vpop.f32.mrb[0].mxu0
        %v824 = vadd.f32 %v456, %v823
        %v825 = vpop.f32.mrb[0].mxu0
        %v826 = vadd.f32 %v460, %v825
        %827 = vmatprep.mubr.f32.mxu0 0.0
        %828 = vmatmul.mubr.f32.gmra.mrb[0].mxu0 %v516
        %v829 = vpop.f32.mrb[0].mxu0
        %v830 = vadd.f32 %v456, %v829
        %v831 = vpop.f32.mrb[0].mxu0
        %v832 = vadd.f32 %v460, %v831
        %833 = vmatprep.mubr.f32.mxu0 0.0
        %834 = vmatmul.mubr.f32.gmra.mrb[0].mxu0 %v519
        %v835 = vpop.f32.mrb[0].mxu0
        %v836 = vadd.f32 %v456, %v835
        %v837 = vpop.f32.mrb[0].mxu0
        %v838 = vadd.f32 %v460, %v837
        %839 = vmatprep.mubr.f32.mxu0 0.0
        %840 = vmatmul.mubr.f32.gmra.mrb[0].mxu0 %v522
        %v841 = vpop.f32.mrb[0].mxu0
        %v842 = vadd.f32 %v456, %v841
        %v843 = vpop.f32.mrb[0].mxu0
        %v844 = vadd.f32 %v460, %v843
        %845 = vdwg.mxu0
        %846 = vmatprep.subr.mxu0 %v436
        %847 = vmatpush1.msra.mxu0 %v435
        %848 = vmatprep.subr.mxu0 %v442
        %849 = vmatpush1.msra.mxu0 %v441
        %850 = vmatprep.subr.mxu0 0.0
        %851 = vmatpush1.msra.mxu0 0.0
        %852 = vmatprep.subr.mxu0 0.0
        %853 = vmatpush1.msra.mxu0 0.0
        %854 = vmatprep.subr.mxu0 0.0
        %855 = vmatpush1.msra.mxu0 0.0
        %856 = vmatprep.subr.mxu0 0.0
        %857 = vmatpush1.msra.mxu0 0.0
        %858 = vmatprep.subr.mxu0 0.0
        %859 = vmatpush1.msra.mxu0 0.0
        %860 = vmatprep.subr.mxu0 0.0
        %861 = vmatpush1.msra.mxu0 0.0
        %862 = vmatprep.subr.mxu0 0.0
        %863 = vmatpush1.msra.mxu0 0.0
        %864 = vmatprep.subr.mxu0 0.0
        %865 = vmatpush1.msra.mxu0 0.0
        %866 = vmatprep.subr.mxu0 0.0
        %867 = vmatpush1.msra.mxu0 0.0
        %868 = vmatprep.subr.mxu0 0.0
        %869 = vmatpush1.msra.mxu0 0.0
        %870 = vmatprep.subr.mxu0 0.0
        %871 = vmatpush1.msra.mxu0 0.0
        %872 = vmatprep.subr.mxu0 0.0
        %873 = vmatpush1.msra.mxu0 0.0
        %874 = vmatprep.subr.mxu0 0.0
        %875 = vmatpush1.msra.mxu0 0.0
        %876 = vmatprep.subr.mxu0 0.0
        %877 = vmatpush1.msra.mxu0 0.0
        %878 = vmatprep.subr.mxu0 0.0
        %879 = vmatpush1.msra.mxu0 0.0
        %880 = vmatprep.subr.mxu0 0.0
        %881 = vmatpush1.msra.mxu0 0.0
        %882 = vmatprep.subr.mxu0 0.0
        %883 = vmatpush1.msra.mxu0 0.0
        %884 = vmatprep.subr.mxu0 0.0
        %885 = vmatpush1.msra.mxu0 0.0
        %886 = vmatprep.subr.mxu0 0.0
        %887 = vmatpush1.msra.mxu0 0.0
        %888 = vmatprep.subr.mxu0 0.0
        %889 = vmatpush1.msra.mxu0 0.0
        %890 = vmatprep.subr.mxu0 0.0
        %891 = vmatpush1.msra.mxu0 0.0
        %892 = vmatprep.subr.mxu0 0.0
        %893 = vmatpush1.msra.mxu0 0.0
        %894 = vmatprep.subr.mxu0 0.0
        %895 = vmatpush1.msra.mxu0 0.0
        %896 = vmatprep.subr.mxu0 0.0
        %897 = vmatpush1.msra.mxu0 0.0
        %898 = vmatprep.subr.mxu0 0.0
        %899 = vmatpush1.msra.mxu0 0.0
        %900 = vmatprep.subr.mxu0 0.0
        %901 = vmatpush1.msra.mxu0 0.0
        %902 = vmatprep.subr.mxu0 0.0
        %903 = vmatpush1.msra.mxu0 0.0
        %904 = vmatprep.subr.mxu0 0.0
        %905 = vmatpush1.msra.mxu0 0.0
        %906 = vmatprep.subr.mxu0 0.0
        %907 = vmatpush1.msra.mxu0 0.0
        %908 = vmatprep.subr.mxu0 0.0
        %909 = vmatpush1.msra.mxu0 0.0
        %910 = vmatprep.mubr.f32.mxu0 0.0
        %911 = vmatmul.mubr.f32.gmra.mrb[0].mxu0 %v477
        %v912 = vpop.f32.mrb[0].mxu0
        %v913 = vadd.f32 %v464, %v912
        %v914 = vpop.f32.mrb[0].mxu0
        %v915 = vadd.f32 %v468, %v914
        %916 = vmatprep.mubr.f32.mxu0 0.0
        %917 = vmatmul.mubr.f32.gmra.mrb[0].mxu0 %v480
        %v918 = vpop.f32.mrb[0].mxu0
        %v919 = vadd.f32 %v464, %v918
        %v920 = vpop.f32.mrb[0].mxu0
        %v921 = vadd.f32 %v468, %v920
        %922 = vmatprep.mubr.f32.mxu0 0.0
        %923 = vmatmul.mubr.f32.gmra.mrb[0].mxu0 %v483
        %v924 = vpop.f32.mrb[0].mxu0
        %v925 = vadd.f32 %v464, %v924
        %v926 = vpop.f32.mrb[0].mxu0
        %v927 = vadd.f32 %v468, %v926
        %928 = vmatprep.mubr.f32.mxu0 0.0
        %929 = vmatmul.mubr.f32.gmra.mrb[0].mxu0 %v486
        %v930 = vpop.f32.mrb[0].mxu0
        %v931 = vadd.f32 %v464, %v930
        %v932 = vpop.f32.mrb[0].mxu0
        %v933 = vadd.f32 %v468, %v932
        %934 = vmatprep.mubr.f32.mxu0 0.0
        %935 = vmatmul.mubr.f32.gmra.mrb[0].mxu0 %v489
        %v936 = vpop.f32.mrb[0].mxu0
        %v937 = vadd.f32 %v464, %v936
        %v938 = vpop.f32.mrb[0].mxu0
        %v939 = vadd.f32 %v468, %v938
        %940 = vmatprep.mubr.f32.mxu0 0.0
        %941 = vmatmul.mubr.f32.gmra.mrb[0].mxu0 %v492
        %v942 = vpop.f32.mrb[0].mxu0
        %v943 = vadd.f32 %v464, %v942
        %v944 = vpop.f32.mrb[0].mxu0
        %v945 = vadd.f32 %v468, %v944
        %946 = vmatprep.mubr.f32.mxu0 0.0
        %947 = vmatmul.mubr.f32.gmra.mrb[0].mxu0 %v495
        %v948 = vpop.f32.mrb[0].mxu0
        %v949 = vadd.f32 %v464, %v948
        %v950 = vpop.f32.mrb[0].mxu0
        %v951 = vadd.f32 %v468, %v950
        %952 = vmatprep.mubr.f32.mxu0 0.0
        %953 = vmatmul.mubr.f32.gmra.mrb[0].mxu0 %v498
        %v954 = vpop.f32.mrb[0].mxu0
        %v955 = vadd.f32 %v464, %v954
        %v956 = vpop.f32.mrb[0].mxu0
        %v957 = vadd.f32 %v468, %v956
        %958 = vmatprep.mubr.f32.mxu0 0.0
        %959 = vmatmul.mubr.f32.gmra.mrb[0].mxu0 %v501
        %v960 = vpop.f32.mrb[0].mxu0
        %v961 = vadd.f32 %v464, %v960
        %v962 = vpop.f32.mrb[0].mxu0
        %v963 = vadd.f32 %v468, %v962
        %964 = vmatprep.mubr.f32.mxu0 0.0
        %965 = vmatmul.mubr.f32.gmra.mrb[0].mxu0 %v504
        %v966 = vpop.f32.mrb[0].mxu0
        %v967 = vadd.f32 %v464, %v966
        %v968 = vpop.f32.mrb[0].mxu0
        %v969 = vadd.f32 %v468, %v968
        %970 = vmatprep.mubr.f32.mxu0 0.0
        %971 = vmatmul.mubr.f32.gmra.mrb[0].mxu0 %v507
        %v972 = vpop.f32.mrb[0].mxu0
        %v973 = vadd.f32 %v464, %v972
        %v974 = vpop.f32.mrb[0].mxu0
        %v975 = vadd.f32 %v468, %v974
        %976 = vmatprep.mubr.f32.mxu0 0.0
        %977 = vmatmul.mubr.f32.gmra.mrb[0].mxu0 %v510
        %v978 = vpop.f32.mrb[0].mxu0
        %v979 = vadd.f32 %v464, %v978
        %v980 = vpop.f32.mrb[0].mxu0
        %v981 = vadd.f32 %v468, %v980
        %982 = vmatprep.mubr.f32.mxu0 0.0
        %983 = vmatmul.mubr.f32.gmra.mrb[0].mxu0 %v513
        %v984 = vpop.f32.mrb[0].mxu0
        %v985 = vadd.f32 %v464, %v984
        %v986 = vpop.f32.mrb[0].mxu0
        %v987 = vadd.f32 %v468, %v986
        %988 = vmatprep.mubr.f32.mxu0 0.0
        %989 = vmatmul.mubr.f32.gmra.mrb[0].mxu0 %v516
        %v990 = vpop.f32.mrb[0].mxu0
        %v991 = vadd.f32 %v464, %v990
        %v992 = vpop.f32.mrb[0].mxu0
        %v993 = vadd.f32 %v468, %v992
        %994 = vmatprep.mubr.f32.mxu0 0.0
        %995 = vmatmul.mubr.f32.gmra.mrb[0].mxu0 %v519
        %v996 = vpop.f32.mrb[0].mxu0
        %v997 = vadd.f32 %v464, %v996
        %v998 = vpop.f32.mrb[0].mxu0
        %v999 = vadd.f32 %v468, %v998
        %1000 = vmatprep.mubr.f32.mxu0 0.0
        %1001 = vmatmul.mubr.f32.gmra.mrb[0].mxu0 %v522
        %v1002 = vpop.f32.mrb[0].mxu0
        %v1003 = vadd.f32 %v464, %v1002
        %v1004 = vpop.f32.mrb[0].mxu0
        %v1005 = vadd.f32 %v468, %v1004
        %1006 = vdwg.mxu0
        %v1007 = vmul.f32 %v591, 0.5
        %v1008 = vmul.f32 %v593, 0.5
        %v1009 = vmul.f32 %v752, 0.5
        %v1010 = vmul.f32 %v754, 0.5
        %v1011 = vmul.f32 %v913, 0.5
        %v1012 = vmul.f32 %v915, 0.5
        %v1013 = vmul.f32 %v597, 0.5
        %v1014 = vmul.f32 %v599, 0.5
        %v1015 = vmul.f32 %v758, 0.5
        %v1016 = vmul.f32 %v760, 0.5
        %v1017 = vmul.f32 %v919, 0.5
        %v1018 = vmul.f32 %v921, 0.5
        %v1019 = vmul.f32 %v603, 0.5
        %v1020 = vmul.f32 %v605, 0.5
        %v1021 = vmul.f32 %v764, 0.5
        %v1022 = vmul.f32 %v766, 0.5
        %v1023 = vmul.f32 %v925, 0.5
        %v1024 = vmul.f32 %v927, 0.5
        %v1025 = vmul.f32 %v609, 0.5
        %v1026 = vmul.f32 %v611, 0.5
        %v1027 = vmul.f32 %v770, 0.5
        %v1028 = vmul.f32 %v772, 0.5
        %v1029 = vmul.f32 %v931, 0.5
        %v1030 = vmul.f32 %v933, 0.5
        %v1031 = vmul.f32 %v615, 0.5
        %v1032 = vmul.f32 %v617, 0.5
        %v1033 = vmul.f32 %v776, 0.5
        %v1034 = vmul.f32 %v778, 0.5
        %v1035 = vmul.f32 %v937, 0.5
        %v1036 = vmul.f32 %v939, 0.5
        %v1037 = vmul.f32 %v621, 0.5
        %v1038 = vmul.f32 %v623, 0.5
        %v1039 = vmul.f32 %v782, 0.5
        %v1040 = vmul.f32 %v784, 0.5
        %v1041 = vmul.f32 %v943, 0.5
        %v1042 = vmul.f32 %v945, 0.5
        %v1043 = vmul.f32 %v627, 0.5
        %v1044 = vmul.f32 %v629, 0.5
        %v1045 = vmul.f32 %v788, 0.5
        %v1046 = vmul.f32 %v790, 0.5
        %v1047 = vmul.f32 %v949, 0.5
        %v1048 = vmul.f32 %v951, 0.5
        %v1049 = vmul.f32 %v633, 0.5
        %v1050 = vmul.f32 %v635, 0.5
        %v1051 = vmul.f32 %v794, 0.5
        %v1052 = vmul.f32 %v796, 0.5
        %v1053 = vmul.f32 %v955, 0.5
        %v1054 = vmul.f32 %v957, 0.5
        %v1055 = vmul.f32 %v639, 0.5
        %v1056 = vmul.f32 %v641, 0.5
        %v1057 = vmul.f32 %v800, 0.5
        %v1058 = vmul.f32 %v802, 0.5
        %v1059 = vmul.f32 %v961, 0.5
        %v1060 = vmul.f32 %v963, 0.5
        %v1061 = vmul.f32 %v645, 0.5
        %v1062 = vmul.f32 %v647, 0.5
        %v1063 = vmul.f32 %v806, 0.5
        %v1064 = vmul.f32 %v808, 0.5
        %v1065 = vmul.f32 %v967, 0.5
        %v1066 = vmul.f32 %v969, 0.5
        %v1067 = vmul.f32 %v651, 0.5
        %v1068 = vmul.f32 %v653, 0.5
        %v1069 = vmul.f32 %v812, 0.5
        %v1070 = vmul.f32 %v814, 0.5
        %v1071 = vmul.f32 %v973, 0.5
        %v1072 = vmul.f32 %v975, 0.5
        %v1073 = vmul.f32 %v657, 0.5
        %v1074 = vmul.f32 %v659, 0.5
        %v1075 = vmul.f32 %v818, 0.5
        %v1076 = vmul.f32 %v820, 0.5
        %v1077 = vmul.f32 %v979, 0.5
        %v1078 = vmul.f32 %v981, 0.5
        %v1079 = vmul.f32 %v663, 0.5
        %v1080 = vmul.f32 %v665, 0.5
        %v1081 = vmul.f32 %v824, 0.5
        %v1082 = vmul.f32 %v826, 0.5
        %v1083 = vmul.f32 %v985, 0.5
        %v1084 = vmul.f32 %v987, 0.5
        %v1085 = vmul.f32 %v669, 0.5
        %v1086 = vmul.f32 %v671, 0.5
        %v1087 = vmul.f32 %v830, 0.5
        %v1088 = vmul.f32 %v832, 0.5
        %v1089 = vmul.f32 %v991, 0.5
        %v1090 = vmul.f32 %v993, 0.5
        %v1091 = vmul.f32 %v675, 0.5
        %v1092 = vmul.f32 %v677, 0.5
        %v1093 = vmul.f32 %v836, 0.5
        %v1094 = vmul.f32 %v838, 0.5
        %v1095 = vmul.f32 %v997, 0.5
        %v1096 = vmul.f32 %v999, 0.5
        %v1097 = vmul.f32 %v681, 0.5
        %v1098 = vmul.f32 %v683, 0.5
        %v1099 = vmul.f32 %v842, 0.5
        %v1100 = vmul.f32 %v844, 0.5
        %v1101 = vmul.f32 %v1003, 0.5
        %v1102 = vmul.f32 %v1005, 0.5
        %v1103 = vmax.f32 %v1007, %v1008
        %v1104 = vmax.f32 %v1103, %v1009
        %v1105 = vmax.f32 %v1104, %v1010
        %v1106 = vmax.f32 %v1105, %v1011
        %v1107 = vmax.f32 %v1106, %v1012
        %1108 = vmax.xlane.f32.xlu0 %v1107
        %v1109 = vpop.xlane.xlu0 %1108
        %v1110 = vmax.f32 %v1013, %v1014
        %v1111 = vmax.f32 %v1110, %v1015
        %v1112 = vmax.f32 %v1111, %v1016
        %v1113 = vmax.f32 %v1112, %v1017
        %v1114 = vmax.f32 %v1113, %v1018
        %1115 = vmax.xlane.f32.xlu0 %v1114
        %v1116 = vpop.xlane.xlu0 %1115
        %v1117 = vmax.f32 %v1019, %v1020
        %v1118 = vmax.f32 %v1117, %v1021
        %v1119 = vmax.f32 %v1118, %v1022
        %v1120 = vmax.f32 %v1119, %v1023
        %v1121 = vmax.f32 %v1120, %v1024
        %1122 = vmax.xlane.f32.xlu0 %v1121
        %v1123 = vpop.xlane.xlu0 %1122
        %v1124 = vmax.f32 %v1025, %v1026
        %v1125 = vmax.f32 %v1124, %v1027
        %v1126 = vmax.f32 %v1125, %v1028
        %v1127 = vmax.f32 %v1126, %v1029
        %v1128 = vmax.f32 %v1127, %v1030
        %1129 = vmax.xlane.f32.xlu0 %v1128
        %v1130 = vpop.xlane.xlu0 %1129
        %v1131 = vmax.f32 %v1031, %v1032
        %v1132 = vmax.f32 %v1131, %v1033
        %v1133 = vmax.f32 %v1132, %v1034
        %v1134 = vmax.f32 %v1133, %v1035
        %v1135 = vmax.f32 %v1134, %v1036
        %1136 = vmax.xlane.f32.xlu0 %v1135
        %v1137 = vpop.xlane.xlu0 %1136
        %v1138 = vmax.f32 %v1037, %v1038
        %v1139 = vmax.f32 %v1138, %v1039
        %v1140 = vmax.f32 %v1139, %v1040
        %v1141 = vmax.f32 %v1140, %v1041
        %v1142 = vmax.f32 %v1141, %v1042
        %1143 = vmax.xlane.f32.xlu0 %v1142
        %v1144 = vpop.xlane.xlu0 %1143
        %v1145 = vmax.f32 %v1043, %v1044
        %v1146 = vmax.f32 %v1145, %v1045
        %v1147 = vmax.f32 %v1146, %v1046
        %v1148 = vmax.f32 %v1147, %v1047
        %v1149 = vmax.f32 %v1148, %v1048
        %1150 = vmax.xlane.f32.xlu0 %v1149
        %v1151 = vpop.xlane.xlu0 %1150
        %v1152 = vmax.f32 %v1049, %v1050
        %v1153 = vmax.f32 %v1152, %v1051
        %v1154 = vmax.f32 %v1153, %v1052
        %v1155 = vmax.f32 %v1154, %v1053
        %v1156 = vmax.f32 %v1155, %v1054
        %1157 = vmax.xlane.f32.xlu0 %v1156
        %v1158 = vpop.xlane.xlu0 %1157
        %v1159 = vmax.f32 %v1055, %v1056
        %v1160 = vmax.f32 %v1159, %v1057
        %v1161 = vmax.f32 %v1160, %v1058
        %v1162 = vmax.f32 %v1161, %v1059
        %v1163 = vmax.f32 %v1162, %v1060
        %1164 = vmax.xlane.f32.xlu0 %v1163
        %v1165 = vpop.xlane.xlu0 %1164
        %v1166 = vmax.f32 %v1061, %v1062
        %v1167 = vmax.f32 %v1166, %v1063
        %v1168 = vmax.f32 %v1167, %v1064
        %v1169 = vmax.f32 %v1168, %v1065
        %v1170 = vmax.f32 %v1169, %v1066
        %1171 = vmax.xlane.f32.xlu0 %v1170
        %v1172 = vpop.xlane.xlu0 %1171
        %v1173 = vmax.f32 %v1067, %v1068
        %v1174 = vmax.f32 %v1173, %v1069
        %v1175 = vmax.f32 %v1174, %v1070
        %v1176 = vmax.f32 %v1175, %v1071
        %v1177 = vmax.f32 %v1176, %v1072
        %1178 = vmax.xlane.f32.xlu0 %v1177
        %v1179 = vpop.xlane.xlu0 %1178
        %v1180 = vmax.f32 %v1073, %v1074
        %v1181 = vmax.f32 %v1180, %v1075
        %v1182 = vmax.f32 %v1181, %v1076
        %v1183 = vmax.f32 %v1182, %v1077
        %v1184 = vmax.f32 %v1183, %v1078
        %1185 = vmax.xlane.f32.xlu0 %v1184
        %v1186 = vpop.xlane.xlu0 %1185
        %v1187 = vmax.f32 %v1079, %v1080
        %v1188 = vmax.f32 %v1187, %v1081
        %v1189 = vmax.f32 %v1188, %v1082
        %v1190 = vmax.f32 %v1189, %v1083
        %v1191 = vmax.f32 %v1190, %v1084
        %1192 = vmax.xlane.f32.xlu0 %v1191
        %v1193 = vpop.xlane.xlu0 %1192
        %v1194 = vmax.f32 %v1085, %v1086
        %v1195 = vmax.f32 %v1194, %v1087
        %v1196 = vmax.f32 %v1195, %v1088
        %v1197 = vmax.f32 %v1196, %v1089
        %v1198 = vmax.f32 %v1197, %v1090
        %1199 = vmax.xlane.f32.xlu0 %v1198
        %v1200 = vpop.xlane.xlu0 %1199
        %v1201 = vmax.f32 %v1091, %v1092
        %v1202 = vmax.f32 %v1201, %v1093
        %v1203 = vmax.f32 %v1202, %v1094
        %v1204 = vmax.f32 %v1203, %v1095
        %v1205 = vmax.f32 %v1204, %v1096
        %1206 = vmax.xlane.f32.xlu0 %v1205
        %v1207 = vpop.xlane.xlu0 %1206
        %v1208 = vmax.f32 %v1097, %v1098
        %v1209 = vmax.f32 %v1208, %v1099
        %v1210 = vmax.f32 %v1209, %v1100
        %v1211 = vmax.f32 %v1210, %v1101
        %v1212 = vmax.f32 %v1211, %v1102
        %1213 = vmax.xlane.f32.xlu0 %v1212
        %v1214 = vpop.xlane.xlu0 %1213
        %v1215 = vsub.f32 %v1007, %v1109
        %v1216 = vsub.f32 %v1008, %v1109
        %v1217 = vsub.f32 %v1009, %v1109
        %v1218 = vsub.f32 %v1010, %v1109
        %v1219 = vsub.f32 %v1011, %v1109
        %v1220 = vsub.f32 %v1012, %v1109
        %v1221 = vsub.f32 %v1013, %v1116
        %v1222 = vsub.f32 %v1014, %v1116
        %v1223 = vsub.f32 %v1015, %v1116
        %v1224 = vsub.f32 %v1016, %v1116
        %v1225 = vsub.f32 %v1017, %v1116
        %v1226 = vsub.f32 %v1018, %v1116
        %v1227 = vsub.f32 %v1019, %v1123
        %v1228 = vsub.f32 %v1020, %v1123
        %v1229 = vsub.f32 %v1021, %v1123
        %v1230 = vsub.f32 %v1022, %v1123
        %v1231 = vsub.f32 %v1023, %v1123
        %v1232 = vsub.f32 %v1024, %v1123
        %v1233 = vsub.f32 %v1025, %v1130
        %v1234 = vsub.f32 %v1026, %v1130
        %v1235 = vsub.f32 %v1027, %v1130
        %v1236 = vsub.f32 %v1028, %v1130
        %v1237 = vsub.f32 %v1029, %v1130
        %v1238 = vsub.f32 %v1030, %v1130
        %v1239 = vsub.f32 %v1031, %v1137
        %v1240 = vsub.f32 %v1032, %v1137
        %v1241 = vsub.f32 %v1033, %v1137
        %v1242 = vsub.f32 %v1034, %v1137
        %v1243 = vsub.f32 %v1035, %v1137
        %v1244 = vsub.f32 %v1036, %v1137
        %v1245 = vsub.f32 %v1037, %v1144
        %v1246 = vsub.f32 %v1038, %v1144
        %v1247 = vsub.f32 %v1039, %v1144
        %v1248 = vsub.f32 %v1040, %v1144
        %v1249 = vsub.f32 %v1041, %v1144
        %v1250 = vsub.f32 %v1042, %v1144
        %v1251 = vsub.f32 %v1043, %v1151
        %v1252 = vsub.f32 %v1044, %v1151
        %v1253 = vsub.f32 %v1045, %v1151
        %v1254 = vsub.f32 %v1046, %v1151
        %v1255 = vsub.f32 %v1047, %v1151
        %v1256 = vsub.f32 %v1048, %v1151
        %v1257 = vsub.f32 %v1049, %v1158
        %v1258 = vsub.f32 %v1050, %v1158
        %v1259 = vsub.f32 %v1051, %v1158
        %v1260 = vsub.f32 %v1052, %v1158
        %v1261 = vsub.f32 %v1053, %v1158
        %v1262 = vsub.f32 %v1054, %v1158
        %v1263 = vsub.f32 %v1055, %v1165
        %v1264 = vsub.f32 %v1056, %v1165
        %v1265 = vsub.f32 %v1057, %v1165
        %v1266 = vsub.f32 %v1058, %v1165
        %v1267 = vsub.f32 %v1059, %v1165
        %v1268 = vsub.f32 %v1060, %v1165
        %v1269 = vsub.f32 %v1061, %v1172
        %v1270 = vsub.f32 %v1062, %v1172
        %v1271 = vsub.f32 %v1063, %v1172
        %v1272 = vsub.f32 %v1064, %v1172
        %v1273 = vsub.f32 %v1065, %v1172
        %v1274 = vsub.f32 %v1066, %v1172
        %v1275 = vsub.f32 %v1067, %v1179
        %v1276 = vsub.f32 %v1068, %v1179
        %v1277 = vsub.f32 %v1069, %v1179
        %v1278 = vsub.f32 %v1070, %v1179
        %v1279 = vsub.f32 %v1071, %v1179
        %v1280 = vsub.f32 %v1072, %v1179
        %v1281 = vsub.f32 %v1073, %v1186
        %v1282 = vsub.f32 %v1074, %v1186
        %v1283 = vsub.f32 %v1075, %v1186
        %v1284 = vsub.f32 %v1076, %v1186
        %v1285 = vsub.f32 %v1077, %v1186
        %v1286 = vsub.f32 %v1078, %v1186
        %v1287 = vsub.f32 %v1079, %v1193
        %v1288 = vsub.f32 %v1080, %v1193
        %v1289 = vsub.f32 %v1081, %v1193
        %v1290 = vsub.f32 %v1082, %v1193
        %v1291 = vsub.f32 %v1083, %v1193
        %v1292 = vsub.f32 %v1084, %v1193
        %v1293 = vsub.f32 %v1085, %v1200
        %v1294 = vsub.f32 %v1086, %v1200
        %v1295 = vsub.f32 %v1087, %v1200
        %v1296 = vsub.f32 %v1088, %v1200
        %v1297 = vsub.f32 %v1089, %v1200
        %v1298 = vsub.f32 %v1090, %v1200
        %v1299 = vsub.f32 %v1091, %v1207
        %v1300 = vsub.f32 %v1092, %v1207
        %v1301 = vsub.f32 %v1093, %v1207
        %v1302 = vsub.f32 %v1094, %v1207
        %v1303 = vsub.f32 %v1095, %v1207
        %v1304 = vsub.f32 %v1096, %v1207
        %v1305 = vsub.f32 %v1097, %v1214
        %v1306 = vsub.f32 %v1098, %v1214
        %v1307 = vsub.f32 %v1099, %v1214
        %v1308 = vsub.f32 %v1100, %v1214
        %v1309 = vsub.f32 %v1101, %v1214
        %v1310 = vsub.f32 %v1102, %v1214
        %v1311 = vmul.f32 %v1215, 1.442695
        %v1312 = vpow.pop %v1311
        %v1313 = vmul.f32 %v1216, 1.442695
        %v1314 = vpow.pop %v1313
        %v1315 = vmul.f32 %v1217, 1.442695
        %v1316 = vpow.pop %v1315
        %v1317 = vmul.f32 %v1218, 1.442695
        %v1318 = vpow.pop %v1317
        %v1319 = vmul.f32 %v1219, 1.442695
        %v1320 = vpow.pop %v1319
        %v1321 = vmul.f32 %v1220, 1.442695
        %v1322 = vpow.pop %v1321
        %v1323 = vmul.f32 %v1221, 1.442695
        %v1324 = vpow.pop %v1323
        %v1325 = vmul.f32 %v1222, 1.442695
        %v1326 = vpow.pop %v1325
        %v1327 = vmul.f32 %v1223, 1.442695
        %v1328 = vpow.pop %v1327
        %v1329 = vmul.f32 %v1224, 1.442695
        %v1330 = vpow.pop %v1329
        %v1331 = vmul.f32 %v1225, 1.442695
        %v1332 = vpow.pop %v1331
        %v1333 = vmul.f32 %v1226, 1.442695
        %v1334 = vpow.pop %v1333
        %v1335 = vmul.f32 %v1227, 1.442695
        %v1336 = vpow.pop %v1335
        %v1337 = vmul.f32 %v1228, 1.442695
        %v1338 = vpow.pop %v1337
        %v1339 = vmul.f32 %v1229, 1.442695
        %v1340 = vpow.pop %v1339
        %v1341 = vmul.f32 %v1230, 1.442695
        %v1342 = vpow.pop %v1341
        %v1343 = vmul.f32 %v1231, 1.442695
        %v1344 = vpow.pop %v1343
        %v1345 = vmul.f32 %v1232, 1.442695
        %v1346 = vpow.pop %v1345
        %v1347 = vmul.f32 %v1233, 1.442695
        %v1348 = vpow.pop %v1347
        %v1349 = vmul.f32 %v1234, 1.442695
        %v1350 = vpow.pop %v1349
        %v1351 = vmul.f32 %v1235, 1.442695
        %v1352 = vpow.pop %v1351
        %v1353 = vmul.f32 %v1236, 1.442695
        %v1354 = vpow.pop %v1353
        %v1355 = vmul.f32 %v1237, 1.442695
        %v1356 = vpow.pop %v1355
        %v1357 = vmul.f32 %v1238, 1.442695
        %v1358 = vpow.pop %v1357
        %v1359 = vmul.f32 %v1239, 1.442695
        %v1360 = vpow.pop %v1359
        %v1361 = vmul.f32 %v1240, 1.442695
        %v1362 = vpow.pop %v1361
        %v1363 = vmul.f32 %v1241, 1.442695
        %v1364 = vpow.pop %v1363
        %v1365 = vmul.f32 %v1242, 1.442695
        %v1366 = vpow.pop %v1365
        %v1367 = vmul.f32 %v1243, 1.442695
        %v1368 = vpow.pop %v1367
        %v1369 = vmul.f32 %v1244, 1.442695
        %v1370 = vpow.pop %v1369
        %v1371 = vmul.f32 %v1245, 1.442695
        %v1372 = vpow.pop %v1371
        %v1373 = vmul.f32 %v1246, 1.442695
        %v1374 = vpow.pop %v1373
        %v1375 = vmul.f32 %v1247, 1.442695
        %v1376 = vpow.pop %v1375
        %v1377 = vmul.f32 %v1248, 1.442695
        %v1378 = vpow.pop %v1377
        %v1379 = vmul.f32 %v1249, 1.442695
        %v1380 = vpow.pop %v1379
        %v1381 = vmul.f32 %v1250, 1.442695
        %v1382 = vpow.pop %v1381
        %v1383 = vmul.f32 %v1251, 1.442695
        %v1384 = vpow.pop %v1383
        %v1385 = vmul.f32 %v1252, 1.442695
        %v1386 = vpow.pop %v1385
        %v1387 = vmul.f32 %v1253, 1.442695
        %v1388 = vpow.pop %v1387
        %v1389 = vmul.f32 %v1254, 1.442695
        %v1390 = vpow.pop %v1389
        %v1391 = vmul.f32 %v1255, 1.442695
        %v1392 = vpow.pop %v1391
        %v1393 = vmul.f32 %v1256, 1.442695
        %v1394 = vpow.pop %v1393
        %v1395 = vmul.f32 %v1257, 1.442695
        %v1396 = vpow.pop %v1395
        %v1397 = vmul.f32 %v1258, 1.442695
        %v1398 = vpow.pop %v1397
        %v1399 = vmul.f32 %v1259, 1.442695
        %v1400 = vpow.pop %v1399
        %v1401 = vmul.f32 %v1260, 1.442695
        %v1402 = vpow.pop %v1401
        %v1403 = vmul.f32 %v1261, 1.442695
        %v1404 = vpow.pop %v1403
        %v1405 = vmul.f32 %v1262, 1.442695
        %v1406 = vpow.pop %v1405
        %v1407 = vmul.f32 %v1263, 1.442695
        %v1408 = vpow.pop %v1407
        %v1409 = vmul.f32 %v1264, 1.442695
        %v1410 = vpow.pop %v1409
        %v1411 = vmul.f32 %v1265, 1.442695
        %v1412 = vpow.pop %v1411
        %v1413 = vmul.f32 %v1266, 1.442695
        %v1414 = vpow.pop %v1413
        %v1415 = vmul.f32 %v1267, 1.442695
        %v1416 = vpow.pop %v1415
        %v1417 = vmul.f32 %v1268, 1.442695
        %v1418 = vpow.pop %v1417
        %v1419 = vmul.f32 %v1269, 1.442695
        %v1420 = vpow.pop %v1419
        %v1421 = vmul.f32 %v1270, 1.442695
        %v1422 = vpow.pop %v1421
        %v1423 = vmul.f32 %v1271, 1.442695
        %v1424 = vpow.pop %v1423
        %v1425 = vmul.f32 %v1272, 1.442695
        %v1426 = vpow.pop %v1425
        %v1427 = vmul.f32 %v1273, 1.442695
        %v1428 = vpow.pop %v1427
        %v1429 = vmul.f32 %v1274, 1.442695
        %v1430 = vpow.pop %v1429
        %v1431 = vmul.f32 %v1275, 1.442695
        %v1432 = vpow.pop %v1431
        %v1433 = vmul.f32 %v1276, 1.442695
        %v1434 = vpow.pop %v1433
        %v1435 = vmul.f32 %v1277, 1.442695
        %v1436 = vpow.pop %v1435
        %v1437 = vmul.f32 %v1278, 1.442695
        %v1438 = vpow.pop %v1437
        %v1439 = vmul.f32 %v1279, 1.442695
        %v1440 = vpow.pop %v1439
        %v1441 = vmul.f32 %v1280, 1.442695
        %v1442 = vpow.pop %v1441
        %v1443 = vmul.f32 %v1281, 1.442695
        %v1444 = vpow.pop %v1443
        %v1445 = vmul.f32 %v1282, 1.442695
        %v1446 = vpow.pop %v1445
        %v1447 = vmul.f32 %v1283, 1.442695
        %v1448 = vpow.pop %v1447
        %v1449 = vmul.f32 %v1284, 1.442695
        %v1450 = vpow.pop %v1449
        %v1451 = vmul.f32 %v1285, 1.442695
        %v1452 = vpow.pop %v1451
        %v1453 = vmul.f32 %v1286, 1.442695
        %v1454 = vpow.pop %v1453
        %v1455 = vmul.f32 %v1287, 1.442695
        %v1456 = vpow.pop %v1455
        %v1457 = vmul.f32 %v1288, 1.442695
        %v1458 = vpow.pop %v1457
        %v1459 = vmul.f32 %v1289, 1.442695
        %v1460 = vpow.pop %v1459
        %v1461 = vmul.f32 %v1290, 1.442695
        %v1462 = vpow.pop %v1461
        %v1463 = vmul.f32 %v1291, 1.442695
        %v1464 = vpow.pop %v1463
        %v1465 = vmul.f32 %v1292, 1.442695
        %v1466 = vpow.pop %v1465
        %v1467 = vmul.f32 %v1293, 1.442695
        %v1468 = vpow.pop %v1467
        %v1469 = vmul.f32 %v1294, 1.442695
        %v1470 = vpow.pop %v1469
        %v1471 = vmul.f32 %v1295, 1.442695
        %v1472 = vpow.pop %v1471
        %v1473 = vmul.f32 %v1296, 1.442695
        %v1474 = vpow.pop %v1473
        %v1475 = vmul.f32 %v1297, 1.442695
        %v1476 = vpow.pop %v1475
        %v1477 = vmul.f32 %v1298, 1.442695
        %v1478 = vpow.pop %v1477
        %v1479 = vmul.f32 %v1299, 1.442695
        %v1480 = vpow.pop %v1479
        %v1481 = vmul.f32 %v1300, 1.442695
        %v1482 = vpow.pop %v1481
        %v1483 = vmul.f32 %v1301, 1.442695
        %v1484 = vpow.pop %v1483
        %v1485 = vmul.f32 %v1302, 1.442695
        %v1486 = vpow.pop %v1485
        %v1487 = vmul.f32 %v1303, 1.442695
        %v1488 = vpow.pop %v1487
        %v1489 = vmul.f32 %v1304, 1.442695
        %v1490 = vpow.pop %v1489
        %v1491 = vmul.f32 %v1305, 1.442695
        %v1492 = vpow.pop %v1491
        %v1493 = vmul.f32 %v1306, 1.442695
        %v1494 = vpow.pop %v1493
        %v1495 = vmul.f32 %v1307, 1.442695
        %v1496 = vpow.pop %v1495
        %v1497 = vmul.f32 %v1308, 1.442695
        %v1498 = vpow.pop %v1497
        %v1499 = vmul.f32 %v1309, 1.442695
        %v1500 = vpow.pop %v1499
        %v1501 = vmul.f32 %v1310, 1.442695
        %v1502 = vpow.pop %v1501
        %v1503 = vadd.f32 %v1312, %v1314
        %v1504 = vadd.f32 %v1503, %v1316
        %v1505 = vadd.f32 %v1504, %v1318
        %v1506 = vadd.f32 %v1505, %v1320
        %v1507 = vadd.f32 %v1506, %v1322
        %1508 = vadd.xlane.f32.xlu0 %v1507
        %v1509 = vpop.xlane.xlu0 %1508
        %v1510 = vadd.f32 %v1324, %v1326
        %v1511 = vadd.f32 %v1510, %v1328
        %v1512 = vadd.f32 %v1511, %v1330
        %v1513 = vadd.f32 %v1512, %v1332
        %v1514 = vadd.f32 %v1513, %v1334
        %1515 = vadd.xlane.f32.xlu0 %v1514
        %v1516 = vpop.xlane.xlu0 %1515
        %v1517 = vadd.f32 %v1336, %v1338
        %v1518 = vadd.f32 %v1517, %v1340
        %v1519 = vadd.f32 %v1518, %v1342
        %v1520 = vadd.f32 %v1519, %v1344
        %v1521 = vadd.f32 %v1520, %v1346
        %1522 = vadd.xlane.f32.xlu0 %v1521
        %v1523 = vpop.xlane.xlu0 %1522
        %v1524 = vadd.f32 %v1348, %v1350
        %v1525 = vadd.f32 %v1524, %v1352
        %v1526 = vadd.f32 %v1525, %v1354
        %v1527 = vadd.f32 %v1526, %v1356
        %v1528 = vadd.f32 %v1527, %v1358
        %1529 = vadd.xlane.f32.xlu0 %v1528
        %v1530 = vpop.xlane.xlu0 %1529
        %v1531 = vadd.f32 %v1360, %v1362
        %v1532 = vadd.f32 %v1531, %v1364
        %v1533 = vadd.f32 %v1532, %v1366
        %v1534 = vadd.f32 %v1533, %v1368
        %v1535 = vadd.f32 %v1534, %v1370
        %1536 = vadd.xlane.f32.xlu0 %v1535
        %v1537 = vpop.xlane.xlu0 %1536
        %v1538 = vadd.f32 %v1372, %v1374
        %v1539 = vadd.f32 %v1538, %v1376
        %v1540 = vadd.f32 %v1539, %v1378
        %v1541 = vadd.f32 %v1540, %v1380
        %v1542 = vadd.f32 %v1541, %v1382
        %1543 = vadd.xlane.f32.xlu0 %v1542
        %v1544 = vpop.xlane.xlu0 %1543
        %v1545 = vadd.f32 %v1384, %v1386
        %v1546 = vadd.f32 %v1545, %v1388
        %v1547 = vadd.f32 %v1546, %v1390
        %v1548 = vadd.f32 %v1547, %v1392
        %v1549 = vadd.f32 %v1548, %v1394
        %1550 = vadd.xlane.f32.xlu0 %v1549
        %v1551 = vpop.xlane.xlu0 %1550
        %v1552 = vadd.f32 %v1396, %v1398
        %v1553 = vadd.f32 %v1552, %v1400
        %v1554 = vadd.f32 %v1553, %v1402
        %v1555 = vadd.f32 %v1554, %v1404
        %v1556 = vadd.f32 %v1555, %v1406
        %1557 = vadd.xlane.f32.xlu0 %v1556
        %v1558 = vpop.xlane.xlu0 %1557
        %v1559 = vadd.f32 %v1408, %v1410
        %v1560 = vadd.f32 %v1559, %v1412
        %v1561 = vadd.f32 %v1560, %v1414
        %v1562 = vadd.f32 %v1561, %v1416
        %v1563 = vadd.f32 %v1562, %v1418
        %1564 = vadd.xlane.f32.xlu0 %v1563
        %v1565 = vpop.xlane.xlu0 %1564
        %v1566 = vadd.f32 %v1420, %v1422
        %v1567 = vadd.f32 %v1566, %v1424
        %v1568 = vadd.f32 %v1567, %v1426
        %v1569 = vadd.f32 %v1568, %v1428
        %v1570 = vadd.f32 %v1569, %v1430
        %1571 = vadd.xlane.f32.xlu0 %v1570
        %v1572 = vpop.xlane.xlu0 %1571
        %v1573 = vadd.f32 %v1432, %v1434
        %v1574 = vadd.f32 %v1573, %v1436
        %v1575 = vadd.f32 %v1574, %v1438
        %v1576 = vadd.f32 %v1575, %v1440
        %v1577 = vadd.f32 %v1576, %v1442
        %1578 = vadd.xlane.f32.xlu0 %v1577
        %v1579 = vpop.xlane.xlu0 %1578
        %v1580 = vadd.f32 %v1444, %v1446
        %v1581 = vadd.f32 %v1580, %v1448
        %v1582 = vadd.f32 %v1581, %v1450
        %v1583 = vadd.f32 %v1582, %v1452
        %v1584 = vadd.f32 %v1583, %v1454
        %1585 = vadd.xlane.f32.xlu0 %v1584
        %v1586 = vpop.xlane.xlu0 %1585
        %v1587 = vadd.f32 %v1456, %v1458
        %v1588 = vadd.f32 %v1587, %v1460
        %v1589 = vadd.f32 %v1588, %v1462
        %v1590 = vadd.f32 %v1589, %v1464
        %v1591 = vadd.f32 %v1590, %v1466
        %1592 = vadd.xlane.f32.xlu0 %v1591
        %v1593 = vpop.xlane.xlu0 %1592
        %v1594 = vadd.f32 %v1468, %v1470
        %v1595 = vadd.f32 %v1594, %v1472
        %v1596 = vadd.f32 %v1595, %v1474
        %v1597 = vadd.f32 %v1596, %v1476
        %v1598 = vadd.f32 %v1597, %v1478
        %1599 = vadd.xlane.f32.xlu0 %v1598
        %v1600 = vpop.xlane.xlu0 %1599
        %v1601 = vadd.f32 %v1480, %v1482
        %v1602 = vadd.f32 %v1601, %v1484
        %v1603 = vadd.f32 %v1602, %v1486
        %v1604 = vadd.f32 %v1603, %v1488
        %v1605 = vadd.f32 %v1604, %v1490
        %1606 = vadd.xlane.f32.xlu0 %v1605
        %v1607 = vpop.xlane.xlu0 %1606
        %v1608 = vadd.f32 %v1492, %v1494
        %v1609 = vadd.f32 %v1608, %v1496
        %v1610 = vadd.f32 %v1609, %v1498
        %v1611 = vadd.f32 %v1610, %v1500
        %v1612 = vadd.f32 %v1611, %v1502
        %1613 = vadd.xlane.f32.xlu0 %v1612
        %v1614 = vpop.xlane.xlu0 %1613
        %v1615 = vrcp.pop %v1509
        %v1616 = vrcp.pop %v1516
        %v1617 = vrcp.pop %v1523
        %v1618 = vrcp.pop %v1530
        %v1619 = vrcp.pop %v1537
        %v1620 = vrcp.pop %v1544
        %v1621 = vrcp.pop %v1551
        %v1622 = vrcp.pop %v1558
        %v1623 = vrcp.pop %v1565
        %v1624 = vrcp.pop %v1572
        %v1625 = vrcp.pop %v1579
        %v1626 = vrcp.pop %v1586
        %v1627 = vrcp.pop %v1593
        %v1628 = vrcp.pop %v1600
        %v1629 = vrcp.pop %v1607
        %v1630 = vrcp.pop %v1614
        %v1631 = vmul.f32 %v1312, %v1615
        %v1632 = vmul.f32 %v1314, %v1615
        %v1633 = vmul.f32 %v1316, %v1615
        %v1634 = vmul.f32 %v1318, %v1615
        %v1635 = vmul.f32 %v1320, %v1615
        %v1636 = vmul.f32 %v1322, %v1615
        %v1637 = vmul.f32 %v1324, %v1616
        %v1638 = vmul.f32 %v1326, %v1616
        %v1639 = vmul.f32 %v1328, %v1616
        %v1640 = vmul.f32 %v1330, %v1616
        %v1641 = vmul.f32 %v1332, %v1616
        %v1642 = vmul.f32 %v1334, %v1616
        %v1643 = vmul.f32 %v1336, %v1617
        %v1644 = vmul.f32 %v1338, %v1617
        %v1645 = vmul.f32 %v1340, %v1617
        %v1646 = vmul.f32 %v1342, %v1617
        %v1647 = vmul.f32 %v1344, %v1617
        %v1648 = vmul.f32 %v1346, %v1617
        %v1649 = vmul.f32 %v1348, %v1618
        %v1650 = vmul.f32 %v1350, %v1618
        %v1651 = vmul.f32 %v1352, %v1618
        %v1652 = vmul.f32 %v1354, %v1618
        %v1653 = vmul.f32 %v1356, %v1618
        %v1654 = vmul.f32 %v1358, %v1618
        %v1655 = vmul.f32 %v1360, %v1619
        %v1656 = vmul.f32 %v1362, %v1619
        %v1657 = vmul.f32 %v1364, %v1619
        %v1658 = vmul.f32 %v1366, %v1619
        %v1659 = vmul.f32 %v1368, %v1619
        %v1660 = vmul.f32 %v1370, %v1619
        %v1661 = vmul.f32 %v1372, %v1620
        %v1662 = vmul.f32 %v1374, %v1620
        %v1663 = vmul.f32 %v1376, %v1620
        %v1664 = vmul.f32 %v1378, %v1620
        %v1665 = vmul.f32 %v1380, %v1620
        %v1666 = vmul.f32 %v1382, %v1620
        %v1667 = vmul.f32 %v1384, %v1621
        %v1668 = vmul.f32 %v1386, %v1621
        %v1669 = vmul.f32 %v1388, %v1621
        %v1670 = vmul.f32 %v1390, %v1621
        %v1671 = vmul.f32 %v1392, %v1621
        %v1672 = vmul.f32 %v1394, %v1621
        %v1673 = vmul.f32 %v1396, %v1622
        %v1674 = vmul.f32 %v1398, %v1622
        %v1675 = vmul.f32 %v1400, %v1622
        %v1676 = vmul.f32 %v1402, %v1622
        %v1677 = vmul.f32 %v1404, %v1622
        %v1678 = vmul.f32 %v1406, %v1622
        %v1679 = vmul.f32 %v1408, %v1623
        %v1680 = vmul.f32 %v1410, %v1623
        %v1681 = vmul.f32 %v1412, %v1623
        %v1682 = vmul.f32 %v1414, %v1623
        %v1683 = vmul.f32 %v1416, %v1623
        %v1684 = vmul.f32 %v1418, %v1623
        %v1685 = vmul.f32 %v1420, %v1624
        %v1686 = vmul.f32 %v1422, %v1624
        %v1687 = vmul.f32 %v1424, %v1624
        %v1688 = vmul.f32 %v1426, %v1624
        %v1689 = vmul.f32 %v1428, %v1624
        %v1690 = vmul.f32 %v1430, %v1624
        %v1691 = vmul.f32 %v1432, %v1625
        %v1692 = vmul.f32 %v1434, %v1625
        %v1693 = vmul.f32 %v1436, %v1625
        %v1694 = vmul.f32 %v1438, %v1625
        %v1695 = vmul.f32 %v1440, %v1625
        %v1696 = vmul.f32 %v1442, %v1625
        %v1697 = vmul.f32 %v1444, %v1626
        %v1698 = vmul.f32 %v1446, %v1626
        %v1699 = vmul.f32 %v1448, %v1626
        %v1700 = vmul.f32 %v1450, %v1626
        %v1701 = vmul.f32 %v1452, %v1626
        %v1702 = vmul.f32 %v1454, %v1626
        %v1703 = vmul.f32 %v1456, %v1627
        %v1704 = vmul.f32 %v1458, %v1627
        %v1705 = vmul.f32 %v1460, %v1627
        %v1706 = vmul.f32 %v1462, %v1627
        %v1707 = vmul.f32 %v1464, %v1627
        %v1708 = vmul.f32 %v1466, %v1627
        %v1709 = vmul.f32 %v1468, %v1628
        %v1710 = vmul.f32 %v1470, %v1628
        %v1711 = vmul.f32 %v1472, %v1628
        %v1712 = vmul.f32 %v1474, %v1628
        %v1713 = vmul.f32 %v1476, %v1628
        %v1714 = vmul.f32 %v1478, %v1628
        %v1715 = vmul.f32 %v1480, %v1629
        %v1716 = vmul.f32 %v1482, %v1629
        %v1717 = vmul.f32 %v1484, %v1629
        %v1718 = vmul.f32 %v1486, %v1629
        %v1719 = vmul.f32 %v1488, %v1629
        %v1720 = vmul.f32 %v1490, %v1629
        %v1721 = vmul.f32 %v1492, %v1630
        %v1722 = vmul.f32 %v1494, %v1630
        %v1723 = vmul.f32 %v1496, %v1630
        %v1724 = vmul.f32 %v1498, %v1630
        %v1725 = vmul.f32 %v1500, %v1630
        %v1726 = vmul.f32 %v1502, %v1630
        %v1727 = vld [vmem:[%s403] sm:$0xff]
        %v1728 = vld [vmem:[%s403 + $0x8] sm:$0xff]
        %v1729 = vld [vmem:[%s403 + $0x10] sm:$0xff]
        %v1730 = vld [vmem:[%s403 + $0x18] sm:$0xff]
        %v1731 = vld [vmem:[%s403 + $0x20] sm:$0xff]
        %v1732 = vld [vmem:[%s403 + $0x28] sm:$0xff]
        %v1733 = vld [vmem:[%s403 + $0x30] sm:$0xff]
        %v1734 = vld [vmem:[%s403 + $0x38] sm:$0xff]
        %v1735 = vld [vmem:[%s403 + $0x40] sm:$0xff]
        %v1736 = vld [vmem:[%s403 + $0x48] sm:$0xff]
        %v1737 = vld [vmem:[%s403 + $0x50] sm:$0xff]
        %v1738 = vld [vmem:[%s403 + $0x58] sm:$0xff]
        %v1739 = vld [vmem:[%s403 + $0x60] sm:$0xff]
        %v1740 = vld [vmem:[%s403 + $0x68] sm:$0xff]
        %v1741 = vld [vmem:[%s403 + $0x70] sm:$0xff]
        %v1742 = vld [vmem:[%s403 + $0x78] sm:$0xff]
        %v1743 = vld [vmem:[%s403 + $0x80] sm:$0xff]
        %v1744 = vld [vmem:[%s403 + $0x88] sm:$0xff]
        %v1745 = vld [vmem:[%s403 + $0x90] sm:$0xff]
        %v1746 = vld [vmem:[%s403 + $0x98] sm:$0xff]
        %v1747 = vld [vmem:[%s403 + $0xa0] sm:$0xff]
        %v1748 = vld [vmem:[%s403 + $0xa8] sm:$0xff]
        %v1749 = vld [vmem:[%s403 + $0xb0] sm:$0xff]
        %v1750 = vld [vmem:[%s403 + $0xb8] sm:$0xff]
        %v1751 = vld [vmem:[%s403 + $0xc0] sm:$0xff]
        %v1752 = vld [vmem:[%s403 + $0xc8] sm:$0xff]
        %v1753 = vld [vmem:[%s403 + $0xd0] sm:$0xff]
        %v1754 = vld [vmem:[%s403 + $0xd8] sm:$0xff]
        %v1755 = vld [vmem:[%s403 + $0xe0] sm:$0xff]
        %v1756 = vld [vmem:[%s403 + $0xe8] sm:$0xff]
        %v1757 = vld [vmem:[%s403 + $0xf0] sm:$0xff]
        %v1758 = vld [vmem:[%s403 + $0xf8] sm:$0xff]
        %v1759 = vld [vmem:[%s403 + $0x100] sm:$0xff]
        %v1760 = vld [vmem:[%s403 + $0x108] sm:$0xff]
        %v1761 = vld [vmem:[%s403 + $0x110] sm:$0xff]
        %v1762 = vld [vmem:[%s403 + $0x118] sm:$0xff]
        %v1763 = vld [vmem:[%s403 + $0x120] sm:$0xff]
        %v1764 = vld [vmem:[%s403 + $0x128] sm:$0xff]
        %v1765 = vld [vmem:[%s403 + $0x130] sm:$0xff]
        %v1766 = vld [vmem:[%s403 + $0x138] sm:$0xff]
        %v1767 = vld [vmem:[%s403 + $0x140] sm:$0xff]
        %v1768 = vld [vmem:[%s403 + $0x148] sm:$0xff]
        %v1769 = vld [vmem:[%s403 + $0x150] sm:$0xff]
        %v1770 = vld [vmem:[%s403 + $0x158] sm:$0xff]
        %v1771 = vld [vmem:[%s403 + $0x160] sm:$0xff]
        %v1772 = vld [vmem:[%s403 + $0x168] sm:$0xff]
        %v1773 = vld [vmem:[%s403 + $0x170] sm:$0xff]
        %v1774 = vld [vmem:[%s403 + $0x178] sm:$0xff]
        %v1775 = vld [vmem:[%s403 + $0x180] sm:$0xff]
        %v1776 = vld [vmem:[%s403 + $0x188] sm:$0xff]
        %v1777 = vld [vmem:[%s403 + $0x190] sm:$0xff]
        %v1778 = vld [vmem:[%s403 + $0x198] sm:$0xff]
        %v1779 = vld [vmem:[%s403 + $0x1a0] sm:$0xff]
        %v1780 = vld [vmem:[%s403 + $0x1a8] sm:$0xff]
        %v1781 = vld [vmem:[%s403 + $0x1b0] sm:$0xff]
        %v1782 = vld [vmem:[%s403 + $0x1b8] sm:$0xff]
        %v1783 = vld [vmem:[%s403 + $0x1c0] sm:$0xff]
        %v1784 = vld [vmem:[%s403 + $0x1c8] sm:$0xff]
        %v1785 = vld [vmem:[%s403 + $0x1d0] sm:$0xff]
        %v1786 = vld [vmem:[%s403 + $0x1d8] sm:$0xff]
        %v1787 = vld [vmem:[%s403 + $0x1e0] sm:$0xff]
        %v1788 = vld [vmem:[%s403 + $0x1e8] sm:$0xff]
        %v1789 = vld [vmem:[%s403 + $0x1f0] sm:$0xff]
        %v1790 = vld [vmem:[%s403 + $0x1f8] sm:$0xff]
        %v1791 = vld [vmem:[%s403 + $0x200] sm:$0xff]
        %v1792 = vld [vmem:[%s403 + $0x208] sm:$0xff]
        %v1793 = vld [vmem:[%s403 + $0x210] sm:$0xff]
        %v1794 = vld [vmem:[%s403 + $0x218] sm:$0xff]
        %v1795 = vld [vmem:[%s403 + $0x220] sm:$0xff]
        %v1796 = vld [vmem:[%s403 + $0x228] sm:$0xff]
        %v1797 = vld [vmem:[%s403 + $0x230] sm:$0xff]
        %v1798 = vld [vmem:[%s403 + $0x238] sm:$0xff]
        %v1799 = vld [vmem:[%s403 + $0x240] sm:$0xff]
        %v1800 = vld [vmem:[%s403 + $0x248] sm:$0xff]
        %v1801 = vld [vmem:[%s403 + $0x250] sm:$0xff]
        %v1802 = vld [vmem:[%s403 + $0x258] sm:$0xff]
        %v1803 = vld [vmem:[%s403 + $0x260] sm:$0xff]
        %v1804 = vld [vmem:[%s403 + $0x268] sm:$0xff]
        %v1805 = vld [vmem:[%s403 + $0x270] sm:$0xff]
        %v1806 = vld [vmem:[%s403 + $0x278] sm:$0xff]
        %v1807 = vld [vmem:[%s403 + $0x280] sm:$0xff]
        %v1808 = vld [vmem:[%s403 + $0x288] sm:$0xff]
        %v1809 = vld [vmem:[%s403 + $0x290] sm:$0xff]
        %v1810 = vld [vmem:[%s403 + $0x298] sm:$0xff]
        %v1811 = vld [vmem:[%s403 + $0x2a0] sm:$0xff]
        %v1812 = vld [vmem:[%s403 + $0x2a8] sm:$0xff]
        %v1813 = vld [vmem:[%s403 + $0x2b0] sm:$0xff]
        %v1814 = vld [vmem:[%s403 + $0x2b8] sm:$0xff]
        %v1815 = vld [vmem:[%s403 + $0x2c0] sm:$0xff]
        %v1816 = vld [vmem:[%s403 + $0x2c8] sm:$0xff]
        %v1817 = vld [vmem:[%s403 + $0x2d0] sm:$0xff]
        %v1818 = vld [vmem:[%s403 + $0x2d8] sm:$0xff]
        %v1819 = vld [vmem:[%s403 + $0x2e0] sm:$0xff]
        %v1820 = vld [vmem:[%s403 + $0x2e8] sm:$0xff]
        %v1821 = vld [vmem:[%s403 + $0x2f0] sm:$0xff]
        %v1822 = vld [vmem:[%s403 + $0x2f8] sm:$0xff]
        %v1823 = vld [vmem:[#allocation7] sm:$0x1]
        %v1825 = vlaneseq
        %v1826 = vshrl.u32 %v1825, 7
        %v1827 = vsub.s32 0, %v1826
        %v1828 = vrot.slane %v1823, %v1827
        %1830 = vmatprep.subr.mxu0 0.0
        %1831 = vmatpush1.msra.mxu0 %v1727
        %1832 = vmatprep.subr.mxu0 0.0
        %1833 = vmatpush1.msra.mxu0 %v1728
        %1834 = vmatprep.subr.mxu0 0.0
        %1835 = vmatpush1.msra.mxu0 %v1729
        %1836 = vmatprep.subr.mxu0 0.0
        %1837 = vmatpush1.msra.mxu0 %v1730
        %1838 = vmatprep.subr.mxu0 0.0
        %1839 = vmatpush1.msra.mxu0 %v1731
        %1840 = vmatprep.subr.mxu0 0.0
        %1841 = vmatpush1.msra.mxu0 %v1732
        %1842 = vmatprep.subr.mxu0 0.0
        %1843 = vmatpush1.msra.mxu0 %v1733
        %1844 = vmatprep.subr.mxu0 0.0
        %1845 = vmatpush1.msra.mxu0 %v1734
        %1846 = vmatprep.subr.mxu0 0.0
        %1847 = vmatpush1.msra.mxu0 %v1735
        %1848 = vmatprep.subr.mxu0 0.0
        %1849 = vmatpush1.msra.mxu0 %v1736
        %1850 = vmatprep.subr.mxu0 0.0
        %1851 = vmatpush1.msra.mxu0 %v1737
        %1852 = vmatprep.subr.mxu0 0.0
        %1853 = vmatpush1.msra.mxu0 %v1738
        %1854 = vmatprep.subr.mxu0 0.0
        %1855 = vmatpush1.msra.mxu0 %v1739
        %1856 = vmatprep.subr.mxu0 0.0
        %1857 = vmatpush1.msra.mxu0 %v1740
        %1858 = vmatprep.subr.mxu0 0.0
        %1859 = vmatpush1.msra.mxu0 %v1741
        %1860 = vmatprep.subr.mxu0 0.0
        %1861 = vmatpush1.msra.mxu0 %v1742
        %1862 = vmatprep.subr.mxu0 0.0
        %1863 = vmatpush1.msra.mxu0 %v1743
        %1864 = vmatprep.subr.mxu0 0.0
        %1865 = vmatpush1.msra.mxu0 %v1744
        %1866 = vmatprep.subr.mxu0 0.0
        %1867 = vmatpush1.msra.mxu0 %v1745
        %1868 = vmatprep.subr.mxu0 0.0
        %1869 = vmatpush1.msra.mxu0 %v1746
        %1870 = vmatprep.subr.mxu0 0.0
        %1871 = vmatpush1.msra.mxu0 %v1747
        %1872 = vmatprep.subr.mxu0 0.0
        %1873 = vmatpush1.msra.mxu0 %v1748
        %1874 = vmatprep.subr.mxu0 0.0
        %1875 = vmatpush1.msra.mxu0 %v1749
        %1876 = vmatprep.subr.mxu0 0.0
        %1877 = vmatpush1.msra.mxu0 %v1750
        %1878 = vmatprep.subr.mxu0 0.0
        %1879 = vmatpush1.msra.mxu0 %v1751
        %1880 = vmatprep.subr.mxu0 0.0
        %1881 = vmatpush1.msra.mxu0 %v1752
        %1882 = vmatprep.subr.mxu0 0.0
        %1883 = vmatpush1.msra.mxu0 %v1753
        %1884 = vmatprep.subr.mxu0 0.0
        %1885 = vmatpush1.msra.mxu0 %v1754
        %1886 = vmatprep.subr.mxu0 0.0
        %1887 = vmatpush1.msra.mxu0 %v1755
        %1888 = vmatprep.subr.mxu0 0.0
        %1889 = vmatpush1.msra.mxu0 %v1756
        %1890 = vmatprep.subr.mxu0 0.0
        %1891 = vmatpush1.msra.mxu0 %v1757
        %1892 = vmatprep.subr.mxu0 0.0
        %1893 = vmatpush1.msra.mxu0 %v1758
        %1894 = vmatprep.mubr.f32.mxu0 %v1632
        %1895 = vmatmul.mubr.f32.gmra.mrb[0].mxu0 %v1631
        %v1896 = vpop.f32.mrb[0].mxu0
        %v1897 = vadd.f32 %v1828, %v1896
        %v1898 = vpop.f32.mrb[0].mxu0
        %1899 = vmatprep.mubr.f32.mxu0 %v1638
        %1900 = vmatmul.mubr.f32.gmra.mrb[0].mxu0 %v1637
        %v1901 = vpop.f32.mrb[0].mxu0
        %v1902 = vadd.f32 %v1828, %v1901
        %v1903 = vpop.f32.mrb[0].mxu0
        %1904 = vmatprep.mubr.f32.mxu0 %v1644
        %1905 = vmatmul.mubr.f32.gmra.mrb[0].mxu0 %v1643
        %v1906 = vpop.f32.mrb[0].mxu0
        %v1907 = vadd.f32 %v1828, %v1906
        %v1908 = vpop.f32.mrb[0].mxu0
        %1909 = vmatprep.mubr.f32.mxu0 %v1650
        %1910 = vmatmul.mubr.f32.gmra.mrb[0].mxu0 %v1649
        %v1911 = vpop.f32.mrb[0].mxu0
        %v1912 = vadd.f32 %v1828, %v1911
        %v1913 = vpop.f32.mrb[0].mxu0
        %1914 = vmatprep.mubr.f32.mxu0 %v1656
        %1915 = vmatmul.mubr.f32.gmra.mrb[0].mxu0 %v1655
        %v1916 = vpop.f32.mrb[0].mxu0
        %v1917 = vadd.f32 %v1828, %v1916
        %v1918 = vpop.f32.mrb[0].mxu0
        %1919 = vmatprep.mubr.f32.mxu0 %v1662
        %1920 = vmatmul.mubr.f32.gmra.mrb[0].mxu0 %v1661
        %v1921 = vpop.f32.mrb[0].mxu0
        %v1922 = vadd.f32 %v1828, %v1921
        %v1923 = vpop.f32.mrb[0].mxu0
        %1924 = vmatprep.mubr.f32.mxu0 %v1668
        %1925 = vmatmul.mubr.f32.gmra.mrb[0].mxu0 %v1667
        %v1926 = vpop.f32.mrb[0].mxu0
        %v1927 = vadd.f32 %v1828, %v1926
        %v1928 = vpop.f32.mrb[0].mxu0
        %1929 = vmatprep.mubr.f32.mxu0 %v1674
        %1930 = vmatmul.mubr.f32.gmra.mrb[0].mxu0 %v1673
        %v1931 = vpop.f32.mrb[0].mxu0
        %v1932 = vadd.f32 %v1828, %v1931
        %v1933 = vpop.f32.mrb[0].mxu0
        %1934 = vmatprep.mubr.f32.mxu0 %v1680
        %1935 = vmatmul.mubr.f32.gmra.mrb[0].mxu0 %v1679
        %v1936 = vpop.f32.mrb[0].mxu0
        %v1937 = vadd.f32 %v1828, %v1936
        %v1938 = vpop.f32.mrb[0].mxu0
        %1939 = vmatprep.mubr.f32.mxu0 %v1686
        %1940 = vmatmul.mubr.f32.gmra.mrb[0].mxu0 %v1685
        %v1941 = vpop.f32.mrb[0].mxu0
        %v1942 = vadd.f32 %v1828, %v1941
        %v1943 = vpop.f32.mrb[0].mxu0
        %1944 = vmatprep.mubr.f32.mxu0 %v1692
        %1945 = vmatmul.mubr.f32.gmra.mrb[0].mxu0 %v1691
        %v1946 = vpop.f32.mrb[0].mxu0
        %v1947 = vadd.f32 %v1828, %v1946
        %v1948 = vpop.f32.mrb[0].mxu0
        %1949 = vmatprep.mubr.f32.mxu0 %v1698
        %1950 = vmatmul.mubr.f32.gmra.mrb[0].mxu0 %v1697
        %v1951 = vpop.f32.mrb[0].mxu0
        %v1952 = vadd.f32 %v1828, %v1951
        %v1953 = vpop.f32.mrb[0].mxu0
        %1954 = vmatprep.mubr.f32.mxu0 %v1704
        %1955 = vmatmul.mubr.f32.gmra.mrb[0].mxu0 %v1703
        %v1956 = vpop.f32.mrb[0].mxu0
        %v1957 = vadd.f32 %v1828, %v1956
        %v1958 = vpop.f32.mrb[0].mxu0
        %1959 = vmatprep.mubr.f32.mxu0 %v1710
        %1960 = vmatmul.mubr.f32.gmra.mrb[0].mxu0 %v1709
        %v1961 = vpop.f32.mrb[0].mxu0
        %v1962 = vadd.f32 %v1828, %v1961
        %v1963 = vpop.f32.mrb[0].mxu0
        %1964 = vmatprep.mubr.f32.mxu0 %v1716
        %1965 = vmatmul.mubr.f32.gmra.mrb[0].mxu0 %v1715
        %v1966 = vpop.f32.mrb[0].mxu0
        %v1967 = vadd.f32 %v1828, %v1966
        %v1968 = vpop.f32.mrb[0].mxu0
        %1969 = vmatprep.mubr.f32.mxu0 %v1722
        %1970 = vmatmul.mubr.f32.gmra.mrb[0].mxu0 %v1721
        %v1971 = vpop.f32.mrb[0].mxu0
        %v1972 = vadd.f32 %v1828, %v1971
        %v1973 = vpop.f32.mrb[0].mxu0
        %1974 = vdwg.mxu0
        %1975 = vmatprep.subr.mxu0 0.0
        %1976 = vmatpush1.msra.mxu0 %v1759
        %1977 = vmatprep.subr.mxu0 0.0
        %1978 = vmatpush1.msra.mxu0 %v1760
        %1979 = vmatprep.subr.mxu0 0.0
        %1980 = vmatpush1.msra.mxu0 %v1761
        %1981 = vmatprep.subr.mxu0 0.0
        %1982 = vmatpush1.msra.mxu0 %v1762
        %1983 = vmatprep.subr.mxu0 0.0
        %1984 = vmatpush1.msra.mxu0 %v1763
        %1985 = vmatprep.subr.mxu0 0.0
        %1986 = vmatpush1.msra.mxu0 %v1764
        %1987 = vmatprep.subr.mxu0 0.0
        %1988 = vmatpush1.msra.mxu0 %v1765
        %1989 = vmatprep.subr.mxu0 0.0
        %1990 = vmatpush1.msra.mxu0 %v1766
        %1991 = vmatprep.subr.mxu0 0.0
        %1992 = vmatpush1.msra.mxu0 %v1767
        %1993 = vmatprep.subr.mxu0 0.0
        %1994 = vmatpush1.msra.mxu0 %v1768
        %1995 = vmatprep.subr.mxu0 0.0
        %1996 = vmatpush1.msra.mxu0 %v1769
        %1997 = vmatprep.subr.mxu0 0.0
        %1998 = vmatpush1.msra.mxu0 %v1770
        %1999 = vmatprep.subr.mxu0 0.0
        %2000 = vmatpush1.msra.mxu0 %v1771
        %2001 = vmatprep.subr.mxu0 0.0
        %2002 = vmatpush1.msra.mxu0 %v1772
        %2003 = vmatprep.subr.mxu0 0.0
        %2004 = vmatpush1.msra.mxu0 %v1773
        %2005 = vmatprep.subr.mxu0 0.0
        %2006 = vmatpush1.msra.mxu0 %v1774
        %2007 = vmatprep.subr.mxu0 0.0
        %2008 = vmatpush1.msra.mxu0 %v1775
        %2009 = vmatprep.subr.mxu0 0.0
        %2010 = vmatpush1.msra.mxu0 %v1776
        %2011 = vmatprep.subr.mxu0 0.0
        %2012 = vmatpush1.msra.mxu0 %v1777
        %2013 = vmatprep.subr.mxu0 0.0
        %2014 = vmatpush1.msra.mxu0 %v1778
        %2015 = vmatprep.subr.mxu0 0.0
        %2016 = vmatpush1.msra.mxu0 %v1779
        %2017 = vmatprep.subr.mxu0 0.0
        %2018 = vmatpush1.msra.mxu0 %v1780
        %2019 = vmatprep.subr.mxu0 0.0
        %2020 = vmatpush1.msra.mxu0 %v1781
        %2021 = vmatprep.subr.mxu0 0.0
        %2022 = vmatpush1.msra.mxu0 %v1782
        %2023 = vmatprep.subr.mxu0 0.0
        %2024 = vmatpush1.msra.mxu0 %v1783
        %2025 = vmatprep.subr.mxu0 0.0
        %2026 = vmatpush1.msra.mxu0 %v1784
        %2027 = vmatprep.subr.mxu0 0.0
        %2028 = vmatpush1.msra.mxu0 %v1785
        %2029 = vmatprep.subr.mxu0 0.0
        %2030 = vmatpush1.msra.mxu0 %v1786
        %2031 = vmatprep.subr.mxu0 0.0
        %2032 = vmatpush1.msra.mxu0 %v1787
        %2033 = vmatprep.subr.mxu0 0.0
        %2034 = vmatpush1.msra.mxu0 %v1788
        %2035 = vmatprep.subr.mxu0 0.0
        %2036 = vmatpush1.msra.mxu0 %v1789
        %2037 = vmatprep.subr.mxu0 0.0
        %2038 = vmatpush1.msra.mxu0 %v1790
        %2039 = vmatprep.mubr.f32.mxu0 %v1634
        %2040 = vmatmul.mubr.f32.gmra.mrb[0].mxu0 %v1633
        %v2041 = vpop.f32.mrb[0].mxu0
        %v2042 = vadd.f32 %v1897, %v2041
        %v2043 = vpop.f32.mrb[0].mxu0
        %2044 = vmatprep.mubr.f32.mxu0 %v1640
        %2045 = vmatmul.mubr.f32.gmra.mrb[0].mxu0 %v1639
        %v2046 = vpop.f32.mrb[0].mxu0
        %v2047 = vadd.f32 %v1902, %v2046
        %v2048 = vpop.f32.mrb[0].mxu0
        %2049 = vmatprep.mubr.f32.mxu0 %v1646
        %2050 = vmatmul.mubr.f32.gmra.mrb[0].mxu0 %v1645
        %v2051 = vpop.f32.mrb[0].mxu0
        %v2052 = vadd.f32 %v1907, %v2051
        %v2053 = vpop.f32.mrb[0].mxu0
        %2054 = vmatprep.mubr.f32.mxu0 %v1652
        %2055 = vmatmul.mubr.f32.gmra.mrb[0].mxu0 %v1651
        %v2056 = vpop.f32.mrb[0].mxu0
        %v2057 = vadd.f32 %v1912, %v2056
        %v2058 = vpop.f32.mrb[0].mxu0
        %2059 = vmatprep.mubr.f32.mxu0 %v1658
        %2060 = vmatmul.mubr.f32.gmra.mrb[0].mxu0 %v1657
        %v2061 = vpop.f32.mrb[0].mxu0
        %v2062 = vadd.f32 %v1917, %v2061
        %v2063 = vpop.f32.mrb[0].mxu0
        %2064 = vmatprep.mubr.f32.mxu0 %v1664
        %2065 = vmatmul.mubr.f32.gmra.mrb[0].mxu0 %v1663
        %v2066 = vpop.f32.mrb[0].mxu0
        %v2067 = vadd.f32 %v1922, %v2066
        %v2068 = vpop.f32.mrb[0].mxu0
        %2069 = vmatprep.mubr.f32.mxu0 %v1670
        %2070 = vmatmul.mubr.f32.gmra.mrb[0].mxu0 %v1669
        %v2071 = vpop.f32.mrb[0].mxu0
        %v2072 = vadd.f32 %v1927, %v2071
        %v2073 = vpop.f32.mrb[0].mxu0
        %2074 = vmatprep.mubr.f32.mxu0 %v1676
        %2075 = vmatmul.mubr.f32.gmra.mrb[0].mxu0 %v1675
        %v2076 = vpop.f32.mrb[0].mxu0
        %v2077 = vadd.f32 %v1932, %v2076
        %v2078 = vpop.f32.mrb[0].mxu0
        %2079 = vmatprep.mubr.f32.mxu0 %v1682
        %2080 = vmatmul.mubr.f32.gmra.mrb[0].mxu0 %v1681
        %v2081 = vpop.f32.mrb[0].mxu0
        %v2082 = vadd.f32 %v1937, %v2081
        %v2083 = vpop.f32.mrb[0].mxu0
        %2084 = vmatprep.mubr.f32.mxu0 %v1688
        %2085 = vmatmul.mubr.f32.gmra.mrb[0].mxu0 %v1687
        %v2086 = vpop.f32.mrb[0].mxu0
        %v2087 = vadd.f32 %v1942, %v2086
        %v2088 = vpop.f32.mrb[0].mxu0
        %2089 = vmatprep.mubr.f32.mxu0 %v1694
        %2090 = vmatmul.mubr.f32.gmra.mrb[0].mxu0 %v1693
        %v2091 = vpop.f32.mrb[0].mxu0
        %v2092 = vadd.f32 %v1947, %v2091
        %v2093 = vpop.f32.mrb[0].mxu0
        %2094 = vmatprep.mubr.f32.mxu0 %v1700
        %2095 = vmatmul.mubr.f32.gmra.mrb[0].mxu0 %v1699
        %v2096 = vpop.f32.mrb[0].mxu0
        %v2097 = vadd.f32 %v1952, %v2096
        %v2098 = vpop.f32.mrb[0].mxu0
        %2099 = vmatprep.mubr.f32.mxu0 %v1706
        %2100 = vmatmul.mubr.f32.gmra.mrb[0].mxu0 %v1705
        %v2101 = vpop.f32.mrb[0].mxu0
        %v2102 = vadd.f32 %v1957, %v2101
        %v2103 = vpop.f32.mrb[0].mxu0
        %2104 = vmatprep.mubr.f32.mxu0 %v1712
        %2105 = vmatmul.mubr.f32.gmra.mrb[0].mxu0 %v1711
        %v2106 = vpop.f32.mrb[0].mxu0
        %v2107 = vadd.f32 %v1962, %v2106
        %v2108 = vpop.f32.mrb[0].mxu0
        %2109 = vmatprep.mubr.f32.mxu0 %v1718
        %2110 = vmatmul.mubr.f32.gmra.mrb[0].mxu0 %v1717
        %v2111 = vpop.f32.mrb[0].mxu0
        %v2112 = vadd.f32 %v1967, %v2111
        %v2113 = vpop.f32.mrb[0].mxu0
        %2114 = vmatprep.mubr.f32.mxu0 %v1724
        %2115 = vmatmul.mubr.f32.gmra.mrb[0].mxu0 %v1723
        %v2116 = vpop.f32.mrb[0].mxu0
        %v2117 = vadd.f32 %v1972, %v2116
        %v2118 = vpop.f32.mrb[0].mxu0
        %2119 = vdwg.mxu0
        %2120 = vmatprep.subr.mxu0 0.0
        %2121 = vmatpush1.msra.mxu0 %v1791
        %2122 = vmatprep.subr.mxu0 0.0
        %2123 = vmatpush1.msra.mxu0 %v1792
        %2124 = vmatprep.subr.mxu0 0.0
        %2125 = vmatpush1.msra.mxu0 %v1793
        %2126 = vmatprep.subr.mxu0 0.0
        %2127 = vmatpush1.msra.mxu0 %v1794
        %2128 = vmatprep.subr.mxu0 0.0
        %2129 = vmatpush1.msra.mxu0 %v1795
        %2130 = vmatprep.subr.mxu0 0.0
        %2131 = vmatpush1.msra.mxu0 %v1796
        %2132 = vmatprep.subr.mxu0 0.0
        %2133 = vmatpush1.msra.mxu0 %v1797
        %2134 = vmatprep.subr.mxu0 0.0
        %2135 = vmatpush1.msra.mxu0 %v1798
        %2136 = vmatprep.subr.mxu0 0.0
        %2137 = vmatpush1.msra.mxu0 %v1799
        %2138 = vmatprep.subr.mxu0 0.0
        %2139 = vmatpush1.msra.mxu0 %v1800
        %2140 = vmatprep.subr.mxu0 0.0
        %2141 = vmatpush1.msra.mxu0 %v1801
        %2142 = vmatprep.subr.mxu0 0.0
        %2143 = vmatpush1.msra.mxu0 %v1802
        %2144 = vmatprep.subr.mxu0 0.0
        %2145 = vmatpush1.msra.mxu0 %v1803
        %2146 = vmatprep.subr.mxu0 0.0
        %2147 = vmatpush1.msra.mxu0 %v1804
        %2148 = vmatprep.subr.mxu0 0.0
        %2149 = vmatpush1.msra.mxu0 %v1805
        %2150 = vmatprep.subr.mxu0 0.0
        %2151 = vmatpush1.msra.mxu0 %v1806
        %2152 = vmatprep.subr.mxu0 0.0
        %2153 = vmatpush1.msra.mxu0 %v1807
        %2154 = vmatprep.subr.mxu0 0.0
        %2155 = vmatpush1.msra.mxu0 %v1808
        %2156 = vmatprep.subr.mxu0 0.0
        %2157 = vmatpush1.msra.mxu0 %v1809
        %2158 = vmatprep.subr.mxu0 0.0
        %2159 = vmatpush1.msra.mxu0 %v1810
        %2160 = vmatprep.subr.mxu0 0.0
        %2161 = vmatpush1.msra.mxu0 %v1811
        %2162 = vmatprep.subr.mxu0 0.0
        %2163 = vmatpush1.msra.mxu0 %v1812
        %2164 = vmatprep.subr.mxu0 0.0
        %2165 = vmatpush1.msra.mxu0 %v1813
        %2166 = vmatprep.subr.mxu0 0.0
        %2167 = vmatpush1.msra.mxu0 %v1814
        %2168 = vmatprep.subr.mxu0 0.0
        %2169 = vmatpush1.msra.mxu0 %v1815
        %2170 = vmatprep.subr.mxu0 0.0
        %2171 = vmatpush1.msra.mxu0 %v1816
        %2172 = vmatprep.subr.mxu0 0.0
        %2173 = vmatpush1.msra.mxu0 %v1817
        %2174 = vmatprep.subr.mxu0 0.0
        %2175 = vmatpush1.msra.mxu0 %v1818
        %2176 = vmatprep.subr.mxu0 0.0
        %2177 = vmatpush1.msra.mxu0 %v1819
        %2178 = vmatprep.subr.mxu0 0.0
        %2179 = vmatpush1.msra.mxu0 %v1820
        %2180 = vmatprep.subr.mxu0 0.0
        %2181 = vmatpush1.msra.mxu0 %v1821
        %2182 = vmatprep.subr.mxu0 0.0
        %2183 = vmatpush1.msra.mxu0 %v1822
        %2184 = vmatprep.mubr.f32.mxu0 %v1636
        %2185 = vmatmul.mubr.f32.gmra.mrb[0].mxu0 %v1635
        %v2186 = vpop.f32.mrb[0].mxu0
        %v2187 = vadd.f32 %v2042, %v2186
        %v2188 = vpop.f32.mrb[0].mxu0
        %2189 = vmatprep.mubr.f32.mxu0 %v1642
        %2190 = vmatmul.mubr.f32.gmra.mrb[0].mxu0 %v1641
        %v2191 = vpop.f32.mrb[0].mxu0
        %v2192 = vadd.f32 %v2047, %v2191
        %v2193 = vpop.f32.mrb[0].mxu0
        %2194 = vmatprep.mubr.f32.mxu0 %v1648
        %2195 = vmatmul.mubr.f32.gmra.mrb[0].mxu0 %v1647
        %v2196 = vpop.f32.mrb[0].mxu0
        %v2197 = vadd.f32 %v2052, %v2196
        %v2198 = vpop.f32.mrb[0].mxu0
        %2199 = vmatprep.mubr.f32.mxu0 %v1654
        %2200 = vmatmul.mubr.f32.gmra.mrb[0].mxu0 %v1653
        %v2201 = vpop.f32.mrb[0].mxu0
        %v2202 = vadd.f32 %v2057, %v2201
        %v2203 = vpop.f32.mrb[0].mxu0
        %2204 = vmatprep.mubr.f32.mxu0 %v1660
        %2205 = vmatmul.mubr.f32.gmra.mrb[0].mxu0 %v1659
        %v2206 = vpop.f32.mrb[0].mxu0
        %v2207 = vadd.f32 %v2062, %v2206
        %v2208 = vpop.f32.mrb[0].mxu0
        %2209 = vmatprep.mubr.f32.mxu0 %v1666
        %2210 = vmatmul.mubr.f32.gmra.mrb[0].mxu0 %v1665
        %v2211 = vpop.f32.mrb[0].mxu0
        %v2212 = vadd.f32 %v2067, %v2211
        %v2213 = vpop.f32.mrb[0].mxu0
        %2214 = vmatprep.mubr.f32.mxu0 %v1672
        %2215 = vmatmul.mubr.f32.gmra.mrb[0].mxu0 %v1671
        %v2216 = vpop.f32.mrb[0].mxu0
        %v2217 = vadd.f32 %v2072, %v2216
        %v2218 = vpop.f32.mrb[0].mxu0
        %2219 = vmatprep.mubr.f32.mxu0 %v1678
        %2220 = vmatmul.mubr.f32.gmra.mrb[0].mxu0 %v1677
        %v2221 = vpop.f32.mrb[0].mxu0
        %v2222 = vadd.f32 %v2077, %v2221
        %v2223 = vpop.f32.mrb[0].mxu0
        %2224 = vmatprep.mubr.f32.mxu0 %v1684
        %2225 = vmatmul.mubr.f32.gmra.mrb[0].mxu0 %v1683
        %v2226 = vpop.f32.mrb[0].mxu0
        %v2227 = vadd.f32 %v2082, %v2226
        %v2228 = vpop.f32.mrb[0].mxu0
        %2229 = vmatprep.mubr.f32.mxu0 %v1690
        %2230 = vmatmul.mubr.f32.gmra.mrb[0].mxu0 %v1689
        %v2231 = vpop.f32.mrb[0].mxu0
        %v2232 = vadd.f32 %v2087, %v2231
        %v2233 = vpop.f32.mrb[0].mxu0
        %2234 = vmatprep.mubr.f32.mxu0 %v1696
        %2235 = vmatmul.mubr.f32.gmra.mrb[0].mxu0 %v1695
        %v2236 = vpop.f32.mrb[0].mxu0
        %v2237 = vadd.f32 %v2092, %v2236
        %v2238 = vpop.f32.mrb[0].mxu0
        %2239 = vmatprep.mubr.f32.mxu0 %v1702
        %2240 = vmatmul.mubr.f32.gmra.mrb[0].mxu0 %v1701
        %v2241 = vpop.f32.mrb[0].mxu0
        %v2242 = vadd.f32 %v2097, %v2241
        %v2243 = vpop.f32.mrb[0].mxu0
        %2244 = vmatprep.mubr.f32.mxu0 %v1708
        %2245 = vmatmul.mubr.f32.gmra.mrb[0].mxu0 %v1707
        %v2246 = vpop.f32.mrb[0].mxu0
        %v2247 = vadd.f32 %v2102, %v2246
        %v2248 = vpop.f32.mrb[0].mxu0
        %2249 = vmatprep.mubr.f32.mxu0 %v1714
        %2250 = vmatmul.mubr.f32.gmra.mrb[0].mxu0 %v1713
        %v2251 = vpop.f32.mrb[0].mxu0
        %v2252 = vadd.f32 %v2107, %v2251
        %v2253 = vpop.f32.mrb[0].mxu0
        %2254 = vmatprep.mubr.f32.mxu0 %v1720
        %2255 = vmatmul.mubr.f32.gmra.mrb[0].mxu0 %v1719
        %v2256 = vpop.f32.mrb[0].mxu0
        %v2257 = vadd.f32 %v2112, %v2256
        %v2258 = vpop.f32.mrb[0].mxu0
        %2259 = vmatprep.mubr.f32.mxu0 %v1726
        %2260 = vmatmul.mubr.f32.gmra.mrb[0].mxu0 %v1725
        %v2261 = vpop.f32.mrb[0].mxu0
        %v2262 = vadd.f32 %v2117, %v2261
        %v2263 = vpop.f32.mrb[0].mxu0
        %2264 = vdwg.mxu0
        %2265 = vst.msk [vmem:[%s412] sm:$0xff] %vm475, %v2187
        %2266 = vst.msk [vmem:[%s412 + $0x8] sm:$0xff] %vm475, %v2192
        %2267 = vst.msk [vmem:[%s412 + $0x10] sm:$0xff] %vm475, %v2197
        %2268 = vst.msk [vmem:[%s412 + $0x18] sm:$0xff] %vm475, %v2202
        %2269 = vst.msk [vmem:[%s412 + $0x20] sm:$0xff] %vm475, %v2207
        %2270 = vst.msk [vmem:[%s412 + $0x28] sm:$0xff] %vm475, %v2212
        %2271 = vst.msk [vmem:[%s412 + $0x30] sm:$0xff] %vm475, %v2217
        %2272 = vst.msk [vmem:[%s412 + $0x38] sm:$0xff] %vm475, %v2222
        %2273 = vst.msk [vmem:[%s412 + $0x40] sm:$0xff] %vm475, %v2227
        %2274 = vst.msk [vmem:[%s412 + $0x48] sm:$0xff] %vm475, %v2232
        %2275 = vst.msk [vmem:[%s412 + $0x50] sm:$0xff] %vm475, %v2237
        %2276 = vst.msk [vmem:[%s412 + $0x58] sm:$0xff] %vm475, %v2242
        %2277 = vst.msk [vmem:[%s412 + $0x60] sm:$0xff] %vm475, %v2247
        %2278 = vst.msk [vmem:[%s412 + $0x68] sm:$0xff] %vm475, %v2252
        %2279 = vst.msk [vmem:[%s412 + $0x70] sm:$0xff] %vm475, %v2257
        %2280 = vst.msk [vmem:[%s412 + $0x78] sm:$0xff] %vm475, %v2262
        %2281 = vst [vmem:[%s388] sm:$0xff] %v1631
        %2282 = vst [vmem:[%s388 + $0x8] sm:$0xff] %v1632
        %2283 = vst [vmem:[%s388 + $0x10] sm:$0xff] %v1633
        %2284 = vst [vmem:[%s388 + $0x18] sm:$0xff] %v1634
        %2285 = vst [vmem:[%s388 + $0x20] sm:$0xff] %v1635
        %2286 = vst [vmem:[%s388 + $0x28] sm:$0xff] %v1636
        %2287 = vst [vmem:[%s388 + $0x30] sm:$0xff] %v1637
        %2288 = vst [vmem:[%s388 + $0x38] sm:$0xff] %v1638
        %2289 = vst [vmem:[%s388 + $0x40] sm:$0xff] %v1639
        %2290 = vst [vmem:[%s388 + $0x48] sm:$0xff] %v1640
        %2291 = vst [vmem:[%s388 + $0x50] sm:$0xff] %v1641
        %2292 = vst [vmem:[%s388 + $0x58] sm:$0xff] %v1642
        %2293 = vst [vmem:[%s388 + $0x60] sm:$0xff] %v1643
        %2294 = vst [vmem:[%s388 + $0x68] sm:$0xff] %v1644
        %2295 = vst [vmem:[%s388 + $0x70] sm:$0xff] %v1645
        %2296 = vst [vmem:[%s388 + $0x78] sm:$0xff] %v1646
        %2297 = vst [vmem:[%s388 + $0x80] sm:$0xff] %v1647
        %2298 = vst [vmem:[%s388 + $0x88] sm:$0xff] %v1648
        %2299 = vst [vmem:[%s388 + $0x90] sm:$0xff] %v1649
        %2300 = vst [vmem:[%s388 + $0x98] sm:$0xff] %v1650
        %2301 = vst [vmem:[%s388 + $0xa0] sm:$0xff] %v1651
        %2302 = vst [vmem:[%s388 + $0xa8] sm:$0xff] %v1652
        %2303 = vst [vmem:[%s388 + $0xb0] sm:$0xff] %v1653
        %2304 = vst [vmem:[%s388 + $0xb8] sm:$0xff] %v1654
        %2305 = vst [vmem:[%s388 + $0xc0] sm:$0xff] %v1655
        %2306 = vst [vmem:[%s388 + $0xc8] sm:$0xff] %v1656
        %2307 = vst [vmem:[%s388 + $0xd0] sm:$0xff] %v1657
        %2308 = vst [vmem:[%s388 + $0xd8] sm:$0xff] %v1658
        %2309 = vst [vmem:[%s388 + $0xe0] sm:$0xff] %v1659
        %2310 = vst [vmem:[%s388 + $0xe8] sm:$0xff] %v1660
        %2311 = vst [vmem:[%s388 + $0xf0] sm:$0xff] %v1661
        %2312 = vst [vmem:[%s388 + $0xf8] sm:$0xff] %v1662
        %2313 = vst [vmem:[%s388 + $0x100] sm:$0xff] %v1663
        %2314 = vst [vmem:[%s388 + $0x108] sm:$0xff] %v1664
        %2315 = vst [vmem:[%s388 + $0x110] sm:$0xff] %v1665
        %2316 = vst [vmem:[%s388 + $0x118] sm:$0xff] %v1666
        %2317 = vst [vmem:[%s388 + $0x120] sm:$0xff] %v1667
        %2318 = vst [vmem:[%s388 + $0x128] sm:$0xff] %v1668
        %2319 = vst [vmem:[%s388 + $0x130] sm:$0xff] %v1669
        %2320 = vst [vmem:[%s388 + $0x138] sm:$0xff] %v1670
        %2321 = vst [vmem:[%s388 + $0x140] sm:$0xff] %v1671
        %2322 = vst [vmem:[%s388 + $0x148] sm:$0xff] %v1672
        %2323 = vst [vmem:[%s388 + $0x150] sm:$0xff] %v1673
        %2324 = vst [vmem:[%s388 + $0x158] sm:$0xff] %v1674
        %2325 = vst [vmem:[%s388 + $0x160] sm:$0xff] %v1675
        %2326 = vst [vmem:[%s388 + $0x168] sm:$0xff] %v1676
        %2327 = vst [vmem:[%s388 + $0x170] sm:$0xff] %v1677
        %2328 = vst [vmem:[%s388 + $0x178] sm:$0xff] %v1678
        %2329 = vst [vmem:[%s388 + $0x180] sm:$0xff] %v1679
        %2330 = vst [vmem:[%s388 + $0x188] sm:$0xff] %v1680
        %2331 = vst [vmem:[%s388 + $0x190] sm:$0xff] %v1681
        %2332 = vst [vmem:[%s388 + $0x198] sm:$0xff] %v1682
        %2333 = vst [vmem:[%s388 + $0x1a0] sm:$0xff] %v1683
        %2334 = vst [vmem:[%s388 + $0x1a8] sm:$0xff] %v1684
        %2335 = vst [vmem:[%s388 + $0x1b0] sm:$0xff] %v1685
        %2336 = vst [vmem:[%s388 + $0x1b8] sm:$0xff] %v1686
        %2337 = vst [vmem:[%s388 + $0x1c0] sm:$0xff] %v1687
        %2338 = vst [vmem:[%s388 + $0x1c8] sm:$0xff] %v1688
        %2339 = vst [vmem:[%s388 + $0x1d0] sm:$0xff] %v1689
        %2340 = vst [vmem:[%s388 + $0x1d8] sm:$0xff] %v1690
        %2341 = vst [vmem:[%s388 + $0x1e0] sm:$0xff] %v1691
        %2342 = vst [vmem:[%s388 + $0x1e8] sm:$0xff] %v1692
        %2343 = vst [vmem:[%s388 + $0x1f0] sm:$0xff] %v1693
        %2344 = vst [vmem:[%s388 + $0x1f8] sm:$0xff] %v1694
        %2345 = vst [vmem:[%s388 + $0x200] sm:$0xff] %v1695
        %2346 = vst [vmem:[%s388 + $0x208] sm:$0xff] %v1696
        %2347 = vst [vmem:[%s388 + $0x210] sm:$0xff] %v1697
        %2348 = vst [vmem:[%s388 + $0x218] sm:$0xff] %v1698
        %2349 = vst [vmem:[%s388 + $0x220] sm:$0xff] %v1699
        %2350 = vst [vmem:[%s388 + $0x228] sm:$0xff] %v1700
        %2351 = vst [vmem:[%s388 + $0x230] sm:$0xff] %v1701
        %2352 = vst [vmem:[%s388 + $0x238] sm:$0xff] %v1702
        %2353 = vst [vmem:[%s388 + $0x240] sm:$0xff] %v1703
        %2354 = vst [vmem:[%s388 + $0x248] sm:$0xff] %v1704
        %2355 = vst [vmem:[%s388 + $0x250] sm:$0xff] %v1705
        %2356 = vst [vmem:[%s388 + $0x258] sm:$0xff] %v1706
        %2357 = vst [vmem:[%s388 + $0x260] sm:$0xff] %v1707
        %2358 = vst [vmem:[%s388 + $0x268] sm:$0xff] %v1708
        %2359 = vst [vmem:[%s388 + $0x270] sm:$0xff] %v1709
        %2360 = vst [vmem:[%s388 + $0x278] sm:$0xff] %v1710
        %2361 = vst [vmem:[%s388 + $0x280] sm:$0xff] %v1711
        %2362 = vst [vmem:[%s388 + $0x288] sm:$0xff] %v1712
        %2363 = vst [vmem:[%s388 + $0x290] sm:$0xff] %v1713
        %2364 = vst [vmem:[%s388 + $0x298] sm:$0xff] %v1714
        %2365 = vst [vmem:[%s388 + $0x2a0] sm:$0xff] %v1715
        %2366 = vst [vmem:[%s388 + $0x2a8] sm:$0xff] %v1716
        %2367 = vst [vmem:[%s388 + $0x2b0] sm:$0xff] %v1717
        %2368 = vst [vmem:[%s388 + $0x2b8] sm:$0xff] %v1718
        %2369 = vst [vmem:[%s388 + $0x2c0] sm:$0xff] %v1719
        %2370 = vst [vmem:[%s388 + $0x2c8] sm:$0xff] %v1720
        %2371 = vst [vmem:[%s388 + $0x2d0] sm:$0xff] %v1721
        %2372 = vst [vmem:[%s388 + $0x2d8] sm:$0xff] %v1722
        %2373 = vst [vmem:[%s388 + $0x2e0] sm:$0xff] %v1723
        %2374 = vst [vmem:[%s388 + $0x2e8] sm:$0xff] %v1724
        %2375 = vst [vmem:[%s388 + $0x2f0] sm:$0xff] %v1725
        %2376 = vst [vmem:[%s388 + $0x2f8] sm:$0xff] %v1726
        %s2377 = smul.u32 16, %s32
        %p2378 = scmp.lt.s32.totalorder %s31, 1
        %s2379 = scalar_select %p2378, %s31, 1
        %p2380 = scmp.lt.s32.totalorder %s2377, 63
        %s2381 = scalar_select %p2380, %s2377, 63
        %s2382 = smul.addr %s2379, 64
        %s2383 = sadd.s32 %s2381, %s2382
        %s2384 = smul.addr %s2383, 8
        %s2385 = scalar_lea.vmem %s5, %s2384
        %s2386 = sand.u32 %s204, 1
        %s2387 = scalar_lea.sflag [#allocation4], %s2386
        %s2388 = sand.u32 %s204, 1
        %s2389 = smul.addr %s2388, 768
        %s2390 = scalar_lea.vmem [#allocation8], %s2389
        // Predicated region
        $region53: #{tpu_custom_call.1} parent=39 // pred_check
          %p2391 = pneg %p186
        $region54: #{tpu_custom_call.1} parent=39 // pred_check_branch
          %2393 = sbr.rel (%p2391) target = $region56
        $region55: #{tpu_custom_call.1} parent=39 // pred_region
          %s2394 = smul.u32 16, %s32
        $region56: #{tpu_custom_call.1} parent=39 // pred_fallthru
          _
        // Predicated region
        $region57: #{tpu_custom_call.1} parent=39 // pred_check
          %p2395 = pneg %p214
        $region58: #{tpu_custom_call.1} parent=39 // pred_check_branch
          %2397 = sbr.rel (%p2395) target = $region60
        $region59: #{tpu_custom_call.1} parent=39 // pred_region
          %s2398 = smul.u32 16, %s32
          %s2400 = ssub.s32 12288, 12288
          %2401 = vsyncadd %s2387, %s2400
          %s2402 = smul.addr %s2398, 6
          %s2403 = smul.addr %s31, 384
          %s2404 = sadd.s32 %s2402, %s2403
          %s2405 = smul.addr %s2404, 128
          %s2406 = scalar_lea.hbm %s6, %s2405
          %s2407 = sshll.u32 %s2390, 4
          %s2408 = int_to_ptr.vmem [resolvable:$true] %s2407
          %2413 = dma.vmem_to_hbm [thread:$0]  %s2408, 12288, %s2406, %s2387, 768, 768, 48
        $region60: #{tpu_custom_call.1} parent=39 // pred_fallthru
          _
      $region40: #{tpu_custom_call.1} parent=5 // pred_fallthru
        _
      %p2414 = scmp.le.s32.totalorder 2, %s22
      // Predicated region
      $region61: #{tpu_custom_call.1} parent=5 // pred_check
        %p2415 = pneg %p2414
      $region62: #{tpu_custom_call.1} parent=5 // pred_check_branch
        %2417 = sbr.rel (%p2415) target = $region64
      $region63: #{tpu_custom_call.1} parent=5 // pred_region
        %s2418 = ssub.s32 %s22, 2
        // Predicated region
        $region65: #{tpu_custom_call.1} parent=63 // pred_check
          %p2419 = pneg %p192
        $region66: #{tpu_custom_call.1} parent=63 // pred_check_branch
          %2421 = sbr.rel (%p2419) target = $region68
        $region67: #{tpu_custom_call.1} parent=63 // pred_region
          %s2422 = smul.u32 16, %s34
          %p2423 = scmp.lt.s32.totalorder %s33, 1
          %s2424 = scalar_select %p2423, %s33, 1
          %p2425 = scmp.lt.s32.totalorder %s2422, 63
          %s2426 = scalar_select %p2425, %s2422, 63
          %s2427 = smul.addr %s2424, 64
          %s2428 = sadd.s32 %s2426, %s2427
          %s2429 = smul.addr %s2428, 8
          %s2430 = scalar_lea.vmem %s5, %s2429
        $region68: #{tpu_custom_call.1} parent=63 // pred_fallthru
          _
        // Predicated region
        $region69: #{tpu_custom_call.1} parent=63 // pred_check
          %p2431 = pneg %p220
        $region70: #{tpu_custom_call.1} parent=63 // pred_check_branch
          %2433 = sbr.rel (%p2431) target = $region72
        $region71: #{tpu_custom_call.1} parent=63 // pred_region
          %s2434 = sand.u32 %s205, 1
          %s2435 = scalar_lea.sflag [#allocation4], %s2434
          %s2436 = sand.u32 %s205, 1
          %s2437 = smul.addr %s2436, 768
          %s2438 = scalar_lea.vmem [#allocation8], %s2437
          %2439 = dma.done %s2435, 12288
        $region72: #{tpu_custom_call.1} parent=63 // pred_fallthru
          _
      $region64: #{tpu_custom_call.1} parent=5 // pred_fallthru
        _
    $region6: #{tpu_custom_call.1} parent=1 // loop_footer
      %s26 = sadd.s32 1, %s22
    $region7: #{tpu_custom_call.1} parent=1 // loop_footer_branch
      %21 = sbr.rel target = $region3
    $region8: #{tpu_custom_call.1} parent=1 // loop_exit
      _
    %2440 = vsyncpa [#allocation3], 1
    %s2441 = scalar_lea.sflag [#allocation3], 1
    %2442 = vsyncpa %s2441, 1
    %2443 = vsyncpa [#allocation6], 1
    %s2444 = scalar_lea.sflag [#allocation6], 1
    %2445 = vsyncpa %s2444, 1
    %2446 = vsyncpa [#allocation4], 1
    %s2447 = scalar_lea.sflag [#allocation4], 1
    %2448 = vsyncpa %s2447, 1

</llo_original>
